<compile_context>
chip_gen: v7x
topology: tpu7x:2x2x1
jax: 0.10.0
libtpu: 0.0.40
codegen_flags: <defaults>
</compile_context>

<pallas_src>
import jax
import jax.numpy as jnp
from jax.experimental import pallas as pl
from jax.experimental.pallas import tpu as pltpu


def _round_up(x, m):
    return ((x + m - 1) // m) * m


def _vmem_capacity_bytes():
    try:
        return int(pltpu.get_tpu_info().vmem_capacity_bytes)
    except Exception:
        return 64 << 20  # conservative: v7x per-TensorCore VMEM


def _choose_tiles(n, in_feat, rep_p, vmem_cap):
    """Pick (tm, tk). Prefer a fully VMEM-resident w6 (single K block); else a
    K-tiled layout whose tk divides in_feat so the activation needs no pad."""
    budget = int(vmem_cap * 0.70)  # headroom for Mosaic internal scratch
    k_full = _round_up(in_feat, 128)
    n_pad8 = _round_up(n, 8)

    def usage(tm, tk, resident):
        w6_bufs = 1 if resident else 2
        return (2 * tm * tk * 2                # x tiles (bf16, double-buffered)
                + w6_bufs * tk * rep_p * 2     # w6 tiles (bf16)
                + rep_p * rep_p * 2            # w7 (bf16, resident, 1 buffer)
                + 2 * 8 * rep_p * 4            # b6 / b7 (f32, sublane-padded)
                + tm * rep_p * 4               # f32 accumulator scratch
                + tm * rep_p * 2               # bf16 hidden scratch
                + 2 * tm * rep_p * 2)          # output tiles (bf16)

    tm_cands = [t for t in (1024, 512, 256, 128, 64, 32, 16, 8) if t <= n_pad8]
    if n_pad8 not in tm_cands:
        tm_cands.append(n_pad8)
    tm_cands = sorted(set(tm_cands), reverse=True)

    # 1) Resident-w6 layout: w6 fetched from HBM exactly once for all rows.
    for tm in tm_cands:
        if usage(tm, k_full, True) <= budget:
            return tm, k_full

    # 2) K-tiled layout: prefer tk that divides in_feat (no activation pad).
    div_tks = []
    if in_feat % 128 == 0:
        div_tks = [d * 128 for d in range(16, 0, -1) if in_feat % (d * 128) == 0]
    tk_cands = div_tks + [1536, 1024, 768, 512, 384, 256, 128]
    for tm in tm_cands:
        for tk in tk_cands:
            tk = min(tk, k_full)
            if usage(tm, tk, False) <= budget:
                return tm, tk
    return 8, 128


def two_mlp_head_kernel(x_ref, w6_ref, b6_ref, w7_ref, b7_ref, o_ref,
                        acc_ref, h_ref):
    k = pl.program_id(1)

    # Partial fc6: (tm, tk) @ (tk, rep_p) on the MXU (bf16 in, f32 accumulate).
    partial = jnp.dot(x_ref[...], w6_ref[...], preferred_element_type=jnp.float32)

    @pl.when(k == 0)
    def _():
        acc_ref[...] = partial        # direct write: no zero-init RMW step

    @pl.when(k > 0)
    def _():
        acc_ref[...] += partial

    @pl.when(k == pl.num_programs(1) - 1)
    def _():
        # Stage fc6 bias+ReLU through an explicit bf16 scratch to limit the
        # f32 temporaries (vreg / internal-scratch pressure in the finalize).
        h_ref[...] = jnp.maximum(acc_ref[...] + b6_ref[...], 0.0).astype(h_ref.dtype)
        o = jnp.dot(h_ref[...], w7_ref[...], preferred_element_type=jnp.float32)
        o_ref[...] = jnp.maximum(o + b7_ref[...], 0.0).astype(o_ref.dtype)


def two_mlp_head(x_nchw, w6, b6, w7, b7, *, tm=None, tk=None):
    """TwoMLPHead forward. x_nchw: (N,C,H,W); w6: (C*H*W, R) = fc6.weight^T;
    b6: (1,R); w7: (R,R) = fc7.weight^T; b7: (1,R). Returns (N,R) in x dtype."""
    n = x_nchw.shape[0]
    in_feat = w6.shape[0]
    rep = w6.shape[1]
    out_dtype = x_nchw.dtype

    vmem_cap = _vmem_capacity_bytes()
    rep_p = _round_up(rep, 128)

    auto_tm, auto_tk = _choose_tiles(n, in_feat, rep_p, vmem_cap)
    if tm is None:
        tm = auto_tm
    if tk is None:
        tk = auto_tk

    # v7x megacore: keep >=2 ROI-row tiles on the "parallel" axis when possible
    # so both TensorCores get work.
    n_pad8 = _round_up(n, 8)
    if vmem_cap <= (72 << 20) and n_pad8 >= 16 and _round_up(n_pad8, tm) // tm < 2:
        tm = _round_up((n_pad8 + 1) // 2, 8)

    n_p = _round_up(n, tm)
    k_p = _round_up(in_feat, tk)
    resident_w6 = (k_p // tk == 1)

    # --- flatten + (conditionally) pad + cast -----------------------------
    x2d = x_nchw.reshape(n, in_feat)              # == torch.flatten(start_dim=1)
    if (n_p, k_p) != (n, in_feat):                # no-op when shapes align
        x2d = jnp.pad(x2d, ((0, n_p - n), (0, k_p - in_feat)))
    x_p = x2d.astype(jnp.bfloat16)

    w6_p = w6 if (k_p, rep_p) == (in_feat, rep) else jnp.pad(
        w6, ((0, k_p - in_feat), (0, rep_p - rep)))
    w7_p = w7 if rep_p == rep else jnp.pad(w7, ((0, rep_p - rep), (0, rep_p - rep)))
    b6_p = b6 if rep_p == rep else jnp.pad(b6, ((0, 0), (0, rep_p - rep)))
    b7_p = b7 if rep_p == rep else jnp.pad(b7, ((0, 0), (0, rep_p - rep)))
    w6_p = w6_p.astype(jnp.bfloat16)
    w7_p = w7_p.astype(jnp.bfloat16)
    b6_p = b6_p.astype(jnp.float32)
    b7_p = b7_p.astype(jnp.float32)

    grid = (n_p // tm, k_p // tk)

    # VMEM budget with honest buffer counts + headroom, capped below physical.
    w6_bufs = 1 if resident_w6 else 2
    vmem_bytes = (2 * tm * tk * 2 + w6_bufs * tk * rep_p * 2 + rep_p * rep_p * 2
                  + 2 * 8 * rep_p * 4 + tm * rep_p * 4 + tm * rep_p * 2
                  + 2 * tm * rep_p * 2)
    vmem_limit = min(max(int(vmem_bytes * 1.5) + (8 << 20), 32 << 20),
                     int(vmem_cap * 0.85))

    flops = 2 * n_p * k_p * rep_p + 2 * n_p * rep_p * rep_p
    bytes_accessed = (x_p.size * 2 + w6_p.size * 2 + w7_p.size * 2
                      + (b6_p.size + b7_p.size) * 4 + n_p * rep_p * 2)
    cost = pl.CostEstimate(flops=flops, transcendentals=0,
                           bytes_accessed=int(bytes_accessed))

    def build(single_buffer_consts):
        def const_spec(shape):
            idx = lambda i, k: (0, 0)
            if single_buffer_consts:
                try:
                    return pl.BlockSpec(shape, idx, pipeline_mode=pl.Buffered(1))
                except TypeError:
                    pass
            return pl.BlockSpec(shape, idx)

        if resident_w6:
            w6_spec = const_spec((tk, rep_p))                       # resident
        else:
            w6_spec = pl.BlockSpec((tk, rep_p), lambda i, k: (k, 0))

        return pl.pallas_call(
            two_mlp_head_kernel,
            out_shape=jax.ShapeDtypeStruct((n_p, rep_p), jnp.bfloat16),
            grid_spec=pltpu.PrefetchScalarGridSpec(
                num_scalar_prefetch=0,
                grid=grid,
                in_specs=[
                    pl.BlockSpec((tm, tk), lambda i, k: (i, k)),    # x tile
                    w6_spec,                                        # w6
                    const_spec((1, rep_p)),                         # b6 (resident)
                    const_spec((rep_p, rep_p)),                     # w7 (resident)
                    const_spec((1, rep_p)),                         # b7 (resident)
                ],
                out_specs=pl.BlockSpec((tm, rep_p), lambda i, k: (i, 0)),
                scratch_shapes=[pltpu.VMEM((tm, rep_p), jnp.float32),   # fc6 acc
                                pltpu.VMEM((tm, rep_p), jnp.bfloat16)], # hidden
            ),
            compiler_params=pltpu.CompilerParams(
                dimension_semantics=("parallel", "arbitrary"),
                vmem_limit_bytes=vmem_limit,
            ),
            cost_estimate=cost,
        )

    try:
        out = build(True)(x_p, w6_p, b6_p, w7_p, b7_p)
    except Exception:
        # Fall back to default double-buffering if Buffered(1) is unsupported.
        out = build(False)(x_p, w6_p, b6_p, w7_p, b7_p)

    # Drop padded ROI rows / padded rep columns (do not remove this slice),
    # and cast the bf16 kernel output back to the caller's dtype.
    return out[:n, :rep].astype(out_dtype)


# TODO(synk): only the TwoMLPHead box head is kernelized; the rest of
# ObjectDetector (DINO conv/BN/upsample backbone, RPN + AnchorGenerator,
# MultiScaleRoIAlign, NMS / score-threshold post-processing) has no clean
# single-Pallas-kernel equivalent.


if __name__ == "__main__":
    # Small shapes consistent with TwoMLPHead: in_channels = C*H*W, rep size = 128.
    N, C, H, W = 2, 4, 16, 16
    IN_FEAT = C * H * W          # 1024
    REP = 128                    # representation_size

    key = jax.random.PRNGKey(0)
    kx, k6w, k6b, k7w, k7b = jax.random.split(key, 5)

    x = jax.random.normal(kx, (N, C, H, W), dtype=jnp.float32)
    # Deterministic synthetic parameters (stored as (in, out), i.e. torch weight^T).
    w6 = jax.random.normal(k6w, (IN_FEAT, REP), dtype=jnp.float32) * 0.02
    b6 = jax.random.normal(k6b, (1, REP), dtype=jnp.float32) * 0.02
    w7 = jax.random.normal(k7w, (REP, REP), dtype=jnp.float32) * 0.02
    b7 = jax.random.normal(k7b, (1, REP), dtype=jnp.float32) * 0.02

    out = two_mlp_head(x, w6, b6, w7, b7)
    out = jax.block_until_ready(out)

    # Reference in plain JAX with matching bf16 precision on matmul inputs.
    bf = lambda a: a.astype(jnp.bfloat16).astype(jnp.float32)
    x2d = x.reshape(N, -1)
    h_ref = jnp.maximum(bf(x2d) @ bf(w6) + b6, 0.0)
    ref = jnp.maximum(bf(h_ref) @ bf(w7) + b7, 0.0)

    assert out.shape == (N, REP)
    assert jnp.allclose(out, ref, atol=1e-2, rtol=1e-2), float(jnp.max(jnp.abs(out - ref)))

    print("KERNEL_OK")
</pallas_src>

<mosaic_0001>
module attributes {stable_mosaic.version = 11 : i64} {
  func.func @two_mlp_head_kernel(%arg0: i32, %arg1: i32, %arg2: memref<8x1024xbf16, #tpu.memory_space<vmem>>, %arg3: memref<1024x128xbf16, #tpu.memory_space<vmem>>, %arg4: memref<1x128xf32, #tpu.memory_space<vmem>>, %arg5: memref<128x128xbf16, #tpu.memory_space<vmem>>, %arg6: memref<1x128xf32, #tpu.memory_space<vmem>>, %arg7: memref<8x128xbf16, #tpu.memory_space<vmem>>, %arg8: memref<8x128xf32, #tpu.memory_space<vmem>>, %arg9: memref<8x128xbf16, #tpu.memory_space<vmem>>) attributes {dimension_semantics = [#tpu.dimension_semantics<parallel>, #tpu.dimension_semantics<arbitrary>], iteration_bounds = array<i64: 1, 1>, scalar_prefetch = 0 : i64, scratch_operands = 2 : i64, tpu.core_type = #tpu.core_type<tc>, window_params = [{transform_indices = @transform_0, window_bounds = array<i64: 8, 1024>}, {pipeline_mode = #tpu.pipeline_mode<synchronous>, transform_indices = @transform_1, window_bounds = array<i64: 1024, 128>}, {pipeline_mode = #tpu.pipeline_mode<synchronous>, transform_indices = @transform_2, window_bounds = array<i64: 1, 128>}, {pipeline_mode = #tpu.pipeline_mode<synchronous>, transform_indices = @transform_3, window_bounds = array<i64: 128, 128>}, {pipeline_mode = #tpu.pipeline_mode<synchronous>, transform_indices = @transform_4, window_bounds = array<i64: 1, 128>}, {transform_indices = @transform_5, window_bounds = array<i64: 8, 128>}]} {
    %c0 = arith.constant 0 : index
    %c0_0 = arith.constant 0 : index
    %0 = vector.load %arg2[%c0, %c0_0] : memref<8x1024xbf16, #tpu.memory_space<vmem>>, vector<8x1024xbf16>
    %c0_1 = arith.constant 0 : index
    %c0_2 = arith.constant 0 : index
    %1 = vector.load %arg3[%c0_1, %c0_2] : memref<1024x128xbf16, #tpu.memory_space<vmem>>, vector<1024x128xbf16>
    %cst = arith.constant dense<0.000000e+00> : vector<8x128xf32>
    %2 = tpu.matmul %0, %1, %cst {dimension_numbers = #tpu.dot_dimension_numbers<[1], [0], [0], [1], [0, 0, 1, 1], [], []>} : vector<8x1024xbf16>, vector<1024x128xbf16>, vector<8x128xf32> -> vector<8x128xf32>
    %c0_i32 = arith.constant 0 : i32
    %3 = arith.cmpi eq, %arg1, %c0_i32 : i32
    %4 = arith.extui %3 : i1 to i32
    %c0_i32_3 = arith.constant 0 : i32
    %5 = arith.cmpi ne, %4, %c0_i32_3 : i32
    scf.if %5 {
      %c0_8 = arith.constant 0 : index
      %c0_9 = arith.constant 0 : index
      %12 = vector.load %arg8[%c0_8, %c0_9] : memref<8x128xf32, #tpu.memory_space<vmem>>, vector<8x128xf32>
      tpu.vector_store %arg8[%c0_8, %c0_9], %2 {strides = array<i32>} : memref<8x128xf32, #tpu.memory_space<vmem>>, vector<8x128xf32>,
    } else {
    }
    %c0_i32_4 = arith.constant 0 : i32
    %6 = arith.cmpi sgt, %arg1, %c0_i32_4 : i32
    %7 = arith.extui %6 : i1 to i32
    %c0_i32_5 = arith.constant 0 : i32
    %8 = arith.cmpi ne, %7, %c0_i32_5 : i32
    scf.if %8 {
      %c0_8 = arith.constant 0 : index
      %c0_9 = arith.constant 0 : index
      %12 = vector.load %arg8[%c0_8, %c0_9] : memref<8x128xf32, #tpu.memory_space<vmem>>, vector<8x128xf32>
      %13 = arith.addf %12, %2 : vector<8x128xf32>
      %c0_10 = arith.constant 0 : index
      %c0_11 = arith.constant 0 : index
      %14 = vector.load %arg8[%c0_10, %c0_11] : memref<8x128xf32, #tpu.memory_space<vmem>>, vector<8x128xf32>
      tpu.vector_store %arg8[%c0_10, %c0_11], %13 {strides = array<i32>} : memref<8x128xf32, #tpu.memory_space<vmem>>, vector<8x128xf32>,
    } else {
    }
    %c0_i32_6 = arith.constant 0 : i32
    %9 = arith.cmpi eq, %arg1, %c0_i32_6 : i32
    %10 = arith.extui %9 : i1 to i32
    %c0_i32_7 = arith.constant 0 : i32
    %11 = arith.cmpi ne, %10, %c0_i32_7 : i32
    scf.if %11 {
      %c0_8 = arith.constant 0 : index
      %c0_9 = arith.constant 0 : index
      %12 = vector.load %arg8[%c0_8, %c0_9] : memref<8x128xf32, #tpu.memory_space<vmem>>, vector<8x128xf32>
      %c0_10 = arith.constant 0 : index
      %c0_11 = arith.constant 0 : index
      %13 = vector.load %arg4[%c0_10, %c0_11] : memref<1x128xf32, #tpu.memory_space<vmem>>, vector<1x128xf32>
      %14 = vector.broadcast %13 : vector<1x128xf32> to vector<8x128xf32>
      %15 = arith.addf %12, %14 : vector<8x128xf32>
      %cst_12 = arith.constant 0.000000e+00 : f32
      %16 = vector.broadcast %cst_12 : f32 to vector<8x128xf32>
      %17 = arith.maximumf %15, %16 : vector<8x128xf32>
      %18 = arith.truncf %17 : vector<8x128xf32> to vector<8x128xbf16>
      %c0_13 = arith.constant 0 : index
      %c0_14 = arith.constant 0 : index
      %19 = vector.load %arg9[%c0_13, %c0_14] : memref<8x128xbf16, #tpu.memory_space<vmem>>, vector<8x128xbf16>
      tpu.vector_store %arg9[%c0_13, %c0_14], %18 {strides = array<i32>} : memref<8x128xbf16, #tpu.memory_space<vmem>>, vector<8x128xbf16>,
      %c0_15 = arith.constant 0 : index
      %c0_16 = arith.constant 0 : index
      %20 = vector.load %arg9[%c0_15, %c0_16] : memref<8x128xbf16, #tpu.memory_space<vmem>>, vector<8x128xbf16>
      %c0_17 = arith.constant 0 : index
      %c0_18 = arith.constant 0 : index
      %21 = vector.load %arg5[%c0_17, %c0_18] : memref<128x128xbf16, #tpu.memory_space<vmem>>, vector<128x128xbf16>
      %cst_19 = arith.constant dense<0.000000e+00> : vector<8x128xf32>
      %22 = tpu.matmul %20, %21, %cst_19 {dimension_numbers = #tpu.dot_dimension_numbers<[1], [0], [0], [1], [0, 0, 1, 1], [], []>} : vector<8x128xbf16>, vector<128x128xbf16>, vector<8x128xf32> -> vector<8x128xf32>
      %c0_20 = arith.constant 0 : index
      %c0_21 = arith.constant 0 : index
      %23 = vector.load %arg6[%c0_20, %c0_21] : memref<1x128xf32, #tpu.memory_space<vmem>>, vector<1x128xf32>
      %24 = vector.broadcast %23 : vector<1x128xf32> to vector<8x128xf32>
      %25 = arith.addf %22, %24 : vector<8x128xf32>
      %cst_22 = arith.constant 0.000000e+00 : f32
      %26 = vector.broadcast %cst_22 : f32 to vector<8x128xf32>
      %27 = arith.maximumf %25, %26 : vector<8x128xf32>
      %28 = arith.truncf %27 : vector<8x128xf32> to vector<8x128xbf16>
      %c0_23 = arith.constant 0 : index
      %c0_24 = arith.constant 0 : index
      %29 = vector.load %arg7[%c0_23, %c0_24] : memref<8x128xbf16, #tpu.memory_space<vmem>>, vector<8x128xbf16>
      tpu.vector_store %arg7[%c0_23, %c0_24], %28 {strides = array<i32>} : memref<8x128xbf16, #tpu.memory_space<vmem>>, vector<8x128xbf16>,
    } else {
    }
    return
  }
  func.func @transform_0(%arg0: i32, %arg1: i32) -> (i32, i32) {
    %c0_i32 = arith.constant 0 : i32
    return %arg0, %arg1 : i32, i32
  }
  func.func @transform_1(%arg0: i32, %arg1: i32) -> (i32, i32) {
    %c0_i32 = arith.constant 0 : i32
    %c0_i32_0 = arith.constant 0 : i32
    %c0_i32_1 = arith.constant 0 : i32
    return %c0_i32, %c0_i32_0 : i32, i32
  }
  func.func @transform_2(%arg0: i32, %arg1: i32) -> (i32, i32) {
    %c0_i32 = arith.constant 0 : i32
    %c0_i32_0 = arith.constant 0 : i32
    %c0_i32_1 = arith.constant 0 : i32
    return %c0_i32, %c0_i32_0 : i32, i32
  }
  func.func @transform_3(%arg0: i32, %arg1: i32) -> (i32, i32) {
    %c0_i32 = arith.constant 0 : i32
    %c0_i32_0 = arith.constant 0 : i32
    %c0_i32_1 = arith.constant 0 : i32
    return %c0_i32, %c0_i32_0 : i32, i32
  }
  func.func @transform_4(%arg0: i32, %arg1: i32) -> (i32, i32) {
    %c0_i32 = arith.constant 0 : i32
    %c0_i32_0 = arith.constant 0 : i32
    %c0_i32_1 = arith.constant 0 : i32
    return %c0_i32, %c0_i32_0 : i32, i32
  }
  func.func @transform_5(%arg0: i32, %arg1: i32) -> (i32, i32) {
    %c0_i32 = arith.constant 0 : i32
    %c0_i32_0 = arith.constant 0 : i32
    return %arg0, %c0_i32 : i32, i32
  }
}

module attributes {stable_mosaic.version = 11 : i64} {
  func.func @two_mlp_head_kernel(%arg0: i32, %arg1: i32, %arg2: memref<8x1024xbf16, #tpu.memory_space<vmem>>, %arg3: memref<1024x128xbf16, #tpu.memory_space<vmem>>, %arg4: memref<1x128xf32, #tpu.memory_space<vmem>>, %arg5: memref<128x128xbf16, #tpu.memory_space<vmem>>, %arg6: memref<1x128xf32, #tpu.memory_space<vmem>>, %arg7: memref<8x128xbf16, #tpu.memory_space<vmem>>, %arg8: memref<8x128xf32, #tpu.memory_space<vmem>>, %arg9: memref<8x128xbf16, #tpu.memory_space<vmem>>) attributes {dimension_semantics = [#tpu.dimension_semantics<parallel>, #tpu.dimension_semantics<arbitrary>], iteration_bounds = array<i64: 1, 1>, scalar_prefetch = 0 : i64, scratch_operands = 2 : i64, tpu.core_type = #tpu.core_type<tc>, window_params = [{transform_indices = @transform_0, window_bounds = array<i64: 8, 1024>}, {pipeline_mode = #tpu.pipeline_mode<synchronous>, transform_indices = @transform_1, window_bounds = array<i64: 1024, 128>}, {pipeline_mode = #tpu.pipeline_mode<synchronous>, transform_indices = @transform_2, window_bounds = array<i64: 1, 128>}, {pipeline_mode = #tpu.pipeline_mode<synchronous>, transform_indices = @transform_3, window_bounds = array<i64: 128, 128>}, {pipeline_mode = #tpu.pipeline_mode<synchronous>, transform_indices = @transform_4, window_bounds = array<i64: 1, 128>}, {transform_indices = @transform_5, window_bounds = array<i64: 8, 128>}]} {
    %c0 = arith.constant 0 : index
    %c0_0 = arith.constant 0 : index
    %0 = vector.load %arg2[%c0, %c0_0] : memref<8x1024xbf16, #tpu.memory_space<vmem>>, vector<8x1024xbf16>
    %c0_1 = arith.constant 0 : index
    %c0_2 = arith.constant 0 : index
    %1 = vector.load %arg3[%c0_1, %c0_2] : memref<1024x128xbf16, #tpu.memory_space<vmem>>, vector<1024x128xbf16>
    %cst = arith.constant dense<0.000000e+00> : vector<8x128xf32>
    %2 = tpu.matmul %0, %1, %cst {dimension_numbers = #tpu.dot_dimension_numbers<[1], [0], [0], [1], [0, 0, 1, 1], [], []>} : vector<8x1024xbf16>, vector<1024x128xbf16>, vector<8x128xf32> -> vector<8x128xf32>
    %c0_i32 = arith.constant 0 : i32
    %3 = arith.cmpi eq, %arg1, %c0_i32 : i32
    %4 = arith.extui %3 : i1 to i32
    %c0_i32_3 = arith.constant 0 : i32
    %5 = arith.cmpi ne, %4, %c0_i32_3 : i32
    scf.if %5 {
      %c0_8 = arith.constant 0 : index
      %c0_9 = arith.constant 0 : index
      %12 = vector.load %arg8[%c0_8, %c0_9] : memref<8x128xf32, #tpu.memory_space<vmem>>, vector<8x128xf32>
      tpu.vector_store %arg8[%c0_8, %c0_9], %2 {strides = array<i32>} : memref<8x128xf32, #tpu.memory_space<vmem>>, vector<8x128xf32>,
    } else {
    }
    %c0_i32_4 = arith.constant 0 : i32
    %6 = arith.cmpi sgt, %arg1, %c0_i32_4 : i32
    %7 = arith.extui %6 : i1 to i32
    %c0_i32_5 = arith.constant 0 : i32
    %8 = arith.cmpi ne, %7, %c0_i32_5 : i32
    scf.if %8 {
      %c0_8 = arith.constant 0 : index
      %c0_9 = arith.constant 0 : index
      %12 = vector.load %arg8[%c0_8, %c0_9] : memref<8x128xf32, #tpu.memory_space<vmem>>, vector<8x128xf32>
      %13 = arith.addf %12, %2 : vector<8x128xf32>
      %c0_10 = arith.constant 0 : index
      %c0_11 = arith.constant 0 : index
      %14 = vector.load %arg8[%c0_10, %c0_11] : memref<8x128xf32, #tpu.memory_space<vmem>>, vector<8x128xf32>
      tpu.vector_store %arg8[%c0_10, %c0_11], %13 {strides = array<i32>} : memref<8x128xf32, #tpu.memory_space<vmem>>, vector<8x128xf32>,
    } else {
    }
    %c0_i32_6 = arith.constant 0 : i32
    %9 = arith.cmpi eq, %arg1, %c0_i32_6 : i32
    %10 = arith.extui %9 : i1 to i32
    %c0_i32_7 = arith.constant 0 : i32
    %11 = arith.cmpi ne, %10, %c0_i32_7 : i32
    scf.if %11 {
      %c0_8 = arith.constant 0 : index
      %c0_9 = arith.constant 0 : index
      %12 = vector.load %arg8[%c0_8, %c0_9] : memref<8x128xf32, #tpu.memory_space<vmem>>, vector<8x128xf32>
      %c0_10 = arith.constant 0 : index
      %c0_11 = arith.constant 0 : index
      %13 = vector.load %arg4[%c0_10, %c0_11] : memref<1x128xf32, #tpu.memory_space<vmem>>, vector<1x128xf32>
      %14 = vector.broadcast %13 : vector<1x128xf32> to vector<8x128xf32>
      %15 = arith.addf %12, %14 : vector<8x128xf32>
      %cst_12 = arith.constant 0.000000e+00 : f32
      %16 = vector.broadcast %cst_12 : f32 to vector<8x128xf32>
      %17 = arith.maximumf %15, %16 : vector<8x128xf32>
      %18 = arith.truncf %17 : vector<8x128xf32> to vector<8x128xbf16>
      %c0_13 = arith.constant 0 : index
      %c0_14 = arith.constant 0 : index
      %19 = vector.load %arg9[%c0_13, %c0_14] : memref<8x128xbf16, #tpu.memory_space<vmem>>, vector<8x128xbf16>
      tpu.vector_store %arg9[%c0_13, %c0_14], %18 {strides = array<i32>} : memref<8x128xbf16, #tpu.memory_space<vmem>>, vector<8x128xbf16>,
      %c0_15 = arith.constant 0 : index
      %c0_16 = arith.constant 0 : index
      %20 = vector.load %arg9[%c0_15, %c0_16] : memref<8x128xbf16, #tpu.memory_space<vmem>>, vector<8x128xbf16>
      %c0_17 = arith.constant 0 : index
      %c0_18 = arith.constant 0 : index
      %21 = vector.load %arg5[%c0_17, %c0_18] : memref<128x128xbf16, #tpu.memory_space<vmem>>, vector<128x128xbf16>
      %cst_19 = arith.constant dense<0.000000e+00> : vector<8x128xf32>
      %22 = tpu.matmul %20, %21, %cst_19 {dimension_numbers = #tpu.dot_dimension_numbers<[1], [0], [0], [1], [0, 0, 1, 1], [], []>} : vector<8x128xbf16>, vector<128x128xbf16>, vector<8x128xf32> -> vector<8x128xf32>
      %c0_20 = arith.constant 0 : index
      %c0_21 = arith.constant 0 : index
      %23 = vector.load %arg6[%c0_20, %c0_21] : memref<1x128xf32, #tpu.memory_space<vmem>>, vector<1x128xf32>
      %24 = vector.broadcast %23 : vector<1x128xf32> to vector<8x128xf32>
      %25 = arith.addf %22, %24 : vector<8x128xf32>
      %cst_22 = arith.constant 0.000000e+00 : f32
      %26 = vector.broadcast %cst_22 : f32 to vector<8x128xf32>
      %27 = arith.maximumf %25, %26 : vector<8x128xf32>
      %28 = arith.truncf %27 : vector<8x128xf32> to vector<8x128xbf16>
      %c0_23 = arith.constant 0 : index
      %c0_24 = arith.constant 0 : index
      %29 = vector.load %arg7[%c0_23, %c0_24] : memref<8x128xbf16, #tpu.memory_space<vmem>>, vector<8x128xbf16>
      tpu.vector_store %arg7[%c0_23, %c0_24], %28 {strides = array<i32>} : memref<8x128xbf16, #tpu.memory_space<vmem>>, vector<8x128xbf16>,
    } else {
    }
    return
  }
  func.func @transform_0(%arg0: i32, %arg1: i32) -> (i32, i32) {
    %c0_i32 = arith.constant 0 : i32
    return %arg0, %arg1 : i32, i32
  }
  func.func @transform_1(%arg0: i32, %arg1: i32) -> (i32, i32) {
    %c0_i32 = arith.constant 0 : i32
    %c0_i32_0 = arith.constant 0 : i32
    %c0_i32_1 = arith.constant 0 : i32
    return %c0_i32, %c0_i32_0 : i32, i32
  }
  func.func @transform_2(%arg0: i32, %arg1: i32) -> (i32, i32) {
    %c0_i32 = arith.constant 0 : i32
    %c0_i32_0 = arith.constant 0 : i32
    %c0_i32_1 = arith.constant 0 : i32
    return %c0_i32, %c0_i32_0 : i32, i32
  }
  func.func @transform_3(%arg0: i32, %arg1: i32) -> (i32, i32) {
    %c0_i32 = arith.constant 0 : i32
    %c0_i32_0 = arith.constant 0 : i32
    %c0_i32_1 = arith.constant 0 : i32
    return %c0_i32, %c0_i32_0 : i32, i32
  }
  func.func @transform_4(%arg0: i32, %arg1: i32) -> (i32, i32) {
    %c0_i32 = arith.constant 0 : i32
    %c0_i32_0 = arith.constant 0 : i32
    %c0_i32_1 = arith.constant 0 : i32
    return %c0_i32, %c0_i32_0 : i32, i32
  }
  func.func @transform_5(%arg0: i32, %arg1: i32) -> (i32, i32) {
    %c0_i32 = arith.constant 0 : i32
    %c0_i32_0 = arith.constant 0 : i32
    return %arg0, %c0_i32 : i32, i32
  }
}

</mosaic_0001>

<llo_original>
// kernel: tpu_custom_call.1
$region0: #{tpu_custom_call.1}
  #allocation0 [shape = 'u32[]', space=smem, size = 0x4, offset = 0x4, fixed_abs, tag = 'smem constant byte address 0x4 - core index']
  #allocation1 [shape = 'u32[144,128]{1,0:T(1,128)}', space=vmem, size = 0x12000, scoped, tag = 'internal scratch']
  #allocation2 [shape = 'f32[8,128]{1,0:T(8,128)}', space=vmem, size = 0x1000, scoped, tag = 'scratch operand']
  #allocation3 [shape = 'bf16[8,128]{1,0:T(8,128)(2,1)}', space=vmem, size = 0x800, scoped, tag = 'scratch operand']
  %s0 = inlined_call_operand.hbm [shape: bf16[8,1024], index: 0, kind: input, shape index: {}]
  %s1 = inlined_call_operand.hbm [shape: bf16[1024,128], index: 1, kind: input, shape index: {}]
  %s2 = inlined_call_operand.vmem [shape: f32[1,128], index: 2, kind: input, shape index: {}]
  %s3 = inlined_call_operand.hbm [shape: bf16[128,128], index: 3, kind: input, shape index: {}]
  %s4 = inlined_call_operand.vmem [shape: f32[1,128], index: 4, kind: input, shape index: {}]
  %s5 = inlined_call_operand.hbm [shape: bf16[8,128], index: 5, kind: output, shape index: {}]
  %s6 = sld [smem:[#allocation0]]
  $region54: #{tpu_custom_call.1} parent=0
    _
  %s8 = ssub.s32 1, %s6
  %s9 = scalar_select 0, %s8, %s6
  $region1: #{tpu_custom_call.1} parent=0
    #allocation4 [shape = 'u8[16384]{0}', space=vmem, size = 0x4000, scoped, tag = 'input window, operand 0, single buffered']
    #allocation5 [shape = 's32[1]{0}', space=sflag, size = 0x4, scoped, tag = 'scoped memory for tpu_custom_call.1']
    #allocation6 [shape = 's32[1]{0}', space=sflag, size = 0x4, scoped, tag = 'scoped memory for tpu_custom_call.1']
    #allocation7 [shape = 'u8[262144]{0}', space=vmem, size = 0x40000, scoped, tag = 'input window, operand 1, single buffered']
    #allocation8 [shape = 's32[1]{0}', space=sflag, size = 0x4, scoped, tag = 'scoped memory for tpu_custom_call.1']
    #allocation9 [shape = 'u8[32768]{0}', space=vmem, size = 0x8000, scoped, tag = 'input window, operand 3, single buffered']
    #allocation10 [shape = 'u8[2048]{0}', space=vmem, size = 0x800, scoped, tag = 'output window, operand 0, single buffered']
    %10 = vsyncpa [#allocation5], 0
    %11 = vsyncpa [#allocation8], 0
    %12 = vsyncpa [#allocation6], 0
    // Predicated region
    $region2: #{tpu_custom_call.1} parent=1 // pred_check
      _
    $region3: #{tpu_custom_call.1} parent=1 // pred_check_branch
      %14 = sbr.rel (0) target = $region5
    $region4: #{tpu_custom_call.1} parent=1 // pred_region
      %s16 = ssub.s32 512, 512
      %17 = vsyncadd [#allocation5], %s16
      %s19 = sshll.u32 [#allocation4], 4
      %s20 = int_to_ptr.vmem [resolvable:$true] %s19
      %22 = dma.hbm_to_vmem [thread:$0]  %s0, 512, %s20, [#allocation5]
    $region5: #{tpu_custom_call.1} parent=1 // pred_fallthru
      _
    // Predicated region
    $region6: #{tpu_custom_call.1} parent=1 // pred_check
      _
    $region7: #{tpu_custom_call.1} parent=1 // pred_check_branch
      %24 = sbr.rel (0) target = $region9
    $region8: #{tpu_custom_call.1} parent=1 // pred_region
      %s26 = ssub.s32 8192, 8192
      %27 = vsyncadd [#allocation8], %s26
      %s28 = sshll.u32 [#allocation7], 4
      %s29 = int_to_ptr.vmem [resolvable:$true] %s28
      %34 = dma.hbm_to_vmem [thread:$0]  %s1, 8192, %s29, [#allocation8], 64, 64, 4
    $region9: #{tpu_custom_call.1} parent=1 // pred_fallthru
      _
    // Predicated region
    $region10: #{tpu_custom_call.1} parent=1 // pred_check
      _
    $region11: #{tpu_custom_call.1} parent=1 // pred_check_branch
      %36 = sbr.rel (0) target = $region13
    $region12: #{tpu_custom_call.1} parent=1 // pred_region
      _
    $region13: #{tpu_custom_call.1} parent=1 // pred_fallthru
      _
    // Predicated region
    $region14: #{tpu_custom_call.1} parent=1 // pred_check
      _
    $region15: #{tpu_custom_call.1} parent=1 // pred_check_branch
      %38 = sbr.rel (0) target = $region17
    $region16: #{tpu_custom_call.1} parent=1 // pred_region
      %s40 = ssub.s32 1024, 1024
      %41 = vsyncadd [#allocation8], %s40
      %s42 = sshll.u32 [#allocation9], 4
      %s43 = int_to_ptr.vmem [resolvable:$true] %s42
      %48 = dma.hbm_to_vmem [thread:$0]  %s3, 1024, %s43, [#allocation8], 64, 64, 4
    $region17: #{tpu_custom_call.1} parent=1 // pred_fallthru
      _
    // Predicated region
    $region18: #{tpu_custom_call.1} parent=1 // pred_check
      _
    $region19: #{tpu_custom_call.1} parent=1 // pred_check_branch
      %50 = sbr.rel (0) target = $region21
    $region20: #{tpu_custom_call.1} parent=1 // pred_region
      _
    $region21: #{tpu_custom_call.1} parent=1 // pred_fallthru
      _
    // Predicated region
    $region22: #{tpu_custom_call.1} parent=1 // pred_check
      _
    $region23: #{tpu_custom_call.1} parent=1 // pred_check_branch
      %52 = sbr.rel (0) target = $region25
    $region24: #{tpu_custom_call.1} parent=1 // pred_region
      %53 = dma.done [#allocation5], 512
    $region25: #{tpu_custom_call.1} parent=1 // pred_fallthru
      _
    // Predicated region
    $region26: #{tpu_custom_call.1} parent=1 // pred_check
      _
    $region27: #{tpu_custom_call.1} parent=1 // pred_check_branch
      %55 = sbr.rel (0) target = $region29
    $region28: #{tpu_custom_call.1} parent=1 // pred_region
      %56 = dma.done [#allocation8], 8192
    $region29: #{tpu_custom_call.1} parent=1 // pred_fallthru
      _
    // Predicated region
    $region30: #{tpu_custom_call.1} parent=1 // pred_check
      _
    $region31: #{tpu_custom_call.1} parent=1 // pred_check_branch
      %58 = sbr.rel (0) target = $region33
    $region32: #{tpu_custom_call.1} parent=1 // pred_region
      %59 = dma.done [#allocation8], 1024
    $region33: #{tpu_custom_call.1} parent=1 // pred_fallthru
      _
    %v61 = vld [vmem:[#allocation4] sm:$0xff]
    %v62 = vld [vmem:[#allocation4 + $0x8] sm:$0xff]
    %v63 = vld [vmem:[#allocation4 + $0x10] sm:$0xff]
    %v64 = vld [vmem:[#allocation4 + $0x18] sm:$0xff]
    %v65 = vld [vmem:[#allocation7] sm:$0xf]
    %v66 = vld [vmem:[#allocation7 + $0x4] sm:$0xf]
    %v67 = vld [vmem:[#allocation7 + $0x8] sm:$0xf]
    %v68 = vld [vmem:[#allocation7 + $0xc] sm:$0xf]
    %v69 = vld [vmem:[#allocation7 + $0x10] sm:$0xf]
    %v70 = vld [vmem:[#allocation7 + $0x14] sm:$0xf]
    %v71 = vld [vmem:[#allocation7 + $0x18] sm:$0xf]
    %v72 = vld [vmem:[#allocation7 + $0x1c] sm:$0xf]
    %v73 = vld [vmem:[#allocation7 + $0x20] sm:$0xf]
    %v74 = vld [vmem:[#allocation7 + $0x24] sm:$0xf]
    %v75 = vld [vmem:[#allocation7 + $0x28] sm:$0xf]
    %v76 = vld [vmem:[#allocation7 + $0x2c] sm:$0xf]
    %v77 = vld [vmem:[#allocation7 + $0x30] sm:$0xf]
    %v78 = vld [vmem:[#allocation7 + $0x34] sm:$0xf]
    %v79 = vld [vmem:[#allocation7 + $0x38] sm:$0xf]
    %v80 = vld [vmem:[#allocation7 + $0x3c] sm:$0xf]
    %v81 = vld [vmem:[#allocation7 + $0x40] sm:$0xf]
    %v82 = vld [vmem:[#allocation7 + $0x44] sm:$0xf]
    %v83 = vld [vmem:[#allocation7 + $0x48] sm:$0xf]
    %v84 = vld [vmem:[#allocation7 + $0x4c] sm:$0xf]
    %v85 = vld [vmem:[#allocation7 + $0x50] sm:$0xf]
    %v86 = vld [vmem:[#allocation7 + $0x54] sm:$0xf]
    %v87 = vld [vmem:[#allocation7 + $0x58] sm:$0xf]
    %v88 = vld [vmem:[#allocation7 + $0x5c] sm:$0xf]
    %v89 = vld [vmem:[#allocation7 + $0x60] sm:$0xf]
    %v90 = vld [vmem:[#allocation7 + $0x64] sm:$0xf]
    %v91 = vld [vmem:[#allocation7 + $0x68] sm:$0xf]
    %v92 = vld [vmem:[#allocation7 + $0x6c] sm:$0xf]
    %v93 = vld [vmem:[#allocation7 + $0x70] sm:$0xf]
    %v94 = vld [vmem:[#allocation7 + $0x74] sm:$0xf]
    %v95 = vld [vmem:[#allocation7 + $0x78] sm:$0xf]
    %v96 = vld [vmem:[#allocation7 + $0x7c] sm:$0xf]
    %v97 = vld [vmem:[#allocation7 + $0x80] sm:$0xf]
    %v98 = vld [vmem:[#allocation7 + $0x84] sm:$0xf]
    %v99 = vld [vmem:[#allocation7 + $0x88] sm:$0xf]
    %v100 = vld [vmem:[#allocation7 + $0x8c] sm:$0xf]
    %v101 = vld [vmem:[#allocation7 + $0x90] sm:$0xf]
    %v102 = vld [vmem:[#allocation7 + $0x94] sm:$0xf]
    %v103 = vld [vmem:[#allocation7 + $0x98] sm:$0xf]
    %v104 = vld [vmem:[#allocation7 + $0x9c] sm:$0xf]
    %v105 = vld [vmem:[#allocation7 + $0xa0] sm:$0xf]
    %v106 = vld [vmem:[#allocation7 + $0xa4] sm:$0xf]
    %v107 = vld [vmem:[#allocation7 + $0xa8] sm:$0xf]
    %v108 = vld [vmem:[#allocation7 + $0xac] sm:$0xf]
    %v109 = vld [vmem:[#allocation7 + $0xb0] sm:$0xf]
    %v110 = vld [vmem:[#allocation7 + $0xb4] sm:$0xf]
    %v111 = vld [vmem:[#allocation7 + $0xb8] sm:$0xf]
    %v112 = vld [vmem:[#allocation7 + $0xbc] sm:$0xf]
    %v113 = vld [vmem:[#allocation7 + $0xc0] sm:$0xf]
    %v114 = vld [vmem:[#allocation7 + $0xc4] sm:$0xf]
    %v115 = vld [vmem:[#allocation7 + $0xc8] sm:$0xf]
    %v116 = vld [vmem:[#allocation7 + $0xcc] sm:$0xf]
    %v117 = vld [vmem:[#allocation7 + $0xd0] sm:$0xf]
    %v118 = vld [vmem:[#allocation7 + $0xd4] sm:$0xf]
    %v119 = vld [vmem:[#allocation7 + $0xd8] sm:$0xf]
    %v120 = vld [vmem:[#allocation7 + $0xdc] sm:$0xf]
    %v121 = vld [vmem:[#allocation7 + $0xe0] sm:$0xf]
    %v122 = vld [vmem:[#allocation7 + $0xe4] sm:$0xf]
    %v123 = vld [vmem:[#allocation7 + $0xe8] sm:$0xf]
    %v124 = vld [vmem:[#allocation7 + $0xec] sm:$0xf]
    %v125 = vld [vmem:[#allocation7 + $0xf0] sm:$0xf]
    %v126 = vld [vmem:[#allocation7 + $0xf4] sm:$0xf]
    %v127 = vld [vmem:[#allocation7 + $0xf8] sm:$0xf]
    %v128 = vld [vmem:[#allocation7 + $0xfc] sm:$0xf]
    %v129 = vld [vmem:[#allocation7 + $0x100] sm:$0xf]
    %v130 = vld [vmem:[#allocation7 + $0x104] sm:$0xf]
    %v131 = vld [vmem:[#allocation7 + $0x108] sm:$0xf]
    %v132 = vld [vmem:[#allocation7 + $0x10c] sm:$0xf]
    %v133 = vld [vmem:[#allocation7 + $0x110] sm:$0xf]
    %v134 = vld [vmem:[#allocation7 + $0x114] sm:$0xf]
    %v135 = vld [vmem:[#allocation7 + $0x118] sm:$0xf]
    %v136 = vld [vmem:[#allocation7 + $0x11c] sm:$0xf]
    %v137 = vld [vmem:[#allocation7 + $0x120] sm:$0xf]
    %v138 = vld [vmem:[#allocation7 + $0x124] sm:$0xf]
    %v139 = vld [vmem:[#allocation7 + $0x128] sm:$0xf]
    %v140 = vld [vmem:[#allocation7 + $0x12c] sm:$0xf]
    %v141 = vld [vmem:[#allocation7 + $0x130] sm:$0xf]
    %v142 = vld [vmem:[#allocation7 + $0x134] sm:$0xf]
    %v143 = vld [vmem:[#allocation7 + $0x138] sm:$0xf]
    %v144 = vld [vmem:[#allocation7 + $0x13c] sm:$0xf]
    %v145 = vld [vmem:[#allocation7 + $0x140] sm:$0xf]
    %v146 = vld [vmem:[#allocation7 + $0x144] sm:$0xf]
    %v147 = vld [vmem:[#allocation7 + $0x148] sm:$0xf]
    %v148 = vld [vmem:[#allocation7 + $0x14c] sm:$0xf]
    %v149 = vld [vmem:[#allocation7 + $0x150] sm:$0xf]
    %v150 = vld [vmem:[#allocation7 + $0x154] sm:$0xf]
    %v151 = vld [vmem:[#allocation7 + $0x158] sm:$0xf]
    %v152 = vld [vmem:[#allocation7 + $0x15c] sm:$0xf]
    %v153 = vld [vmem:[#allocation7 + $0x160] sm:$0xf]
    %v154 = vld [vmem:[#allocation7 + $0x164] sm:$0xf]
    %v155 = vld [vmem:[#allocation7 + $0x168] sm:$0xf]
    %v156 = vld [vmem:[#allocation7 + $0x16c] sm:$0xf]
    %v157 = vld [vmem:[#allocation7 + $0x170] sm:$0xf]
    %v158 = vld [vmem:[#allocation7 + $0x174] sm:$0xf]
    %v159 = vld [vmem:[#allocation7 + $0x178] sm:$0xf]
    %v160 = vld [vmem:[#allocation7 + $0x17c] sm:$0xf]
    %v161 = vld [vmem:[#allocation7 + $0x180] sm:$0xf]
    %v162 = vld [vmem:[#allocation7 + $0x184] sm:$0xf]
    %v163 = vld [vmem:[#allocation7 + $0x188] sm:$0xf]
    %v164 = vld [vmem:[#allocation7 + $0x18c] sm:$0xf]
    %v165 = vld [vmem:[#allocation7 + $0x190] sm:$0xf]
    %v166 = vld [vmem:[#allocation7 + $0x194] sm:$0xf]
    %v167 = vld [vmem:[#allocation7 + $0x198] sm:$0xf]
    %v168 = vld [vmem:[#allocation7 + $0x19c] sm:$0xf]
    %v169 = vld [vmem:[#allocation7 + $0x1a0] sm:$0xf]
    %v170 = vld [vmem:[#allocation7 + $0x1a4] sm:$0xf]
    %v171 = vld [vmem:[#allocation7 + $0x1a8] sm:$0xf]
    %v172 = vld [vmem:[#allocation7 + $0x1ac] sm:$0xf]
    %v173 = vld [vmem:[#allocation7 + $0x1b0] sm:$0xf]
    %v174 = vld [vmem:[#allocation7 + $0x1b4] sm:$0xf]
    %v175 = vld [vmem:[#allocation7 + $0x1b8] sm:$0xf]
    %v176 = vld [vmem:[#allocation7 + $0x1bc] sm:$0xf]
    %v177 = vld [vmem:[#allocation7 + $0x1c0] sm:$0xf]
    %v178 = vld [vmem:[#allocation7 + $0x1c4] sm:$0xf]
    %v179 = vld [vmem:[#allocation7 + $0x1c8] sm:$0xf]
    %v180 = vld [vmem:[#allocation7 + $0x1cc] sm:$0xf]
    %v181 = vld [vmem:[#allocation7 + $0x1d0] sm:$0xf]
    %v182 = vld [vmem:[#allocation7 + $0x1d4] sm:$0xf]
    %v183 = vld [vmem:[#allocation7 + $0x1d8] sm:$0xf]
    %v184 = vld [vmem:[#allocation7 + $0x1dc] sm:$0xf]
    %v185 = vld [vmem:[#allocation7 + $0x1e0] sm:$0xf]
    %v186 = vld [vmem:[#allocation7 + $0x1e4] sm:$0xf]
    %v187 = vld [vmem:[#allocation7 + $0x1e8] sm:$0xf]
    %v188 = vld [vmem:[#allocation7 + $0x1ec] sm:$0xf]
    %v189 = vld [vmem:[#allocation7 + $0x1f0] sm:$0xf]
    %v190 = vld [vmem:[#allocation7 + $0x1f4] sm:$0xf]
    %v191 = vld [vmem:[#allocation7 + $0x1f8] sm:$0xf]
    %v192 = vld [vmem:[#allocation7 + $0x1fc] sm:$0xf]
    %v197 = vunpack.c.l.b16 %v61
    %v198 = vunpack.c.h.b16 %v61
    %v199 = vunpack.c.l.b16 %v62
    %v200 = vunpack.c.h.b16 %v62
    %v201 = vunpack.c.l.b16 %v63
    %v202 = vunpack.c.h.b16 %v63
    %v203 = vunpack.c.l.b16 %v64
    %v204 = vunpack.c.h.b16 %v64
    %v205 = vpack.c.b16 %v197, %v197
    %v206 = vpack.c.b16 %v198, %v198
    %v207 = vpack.c.b16 %v199, %v199
    %v208 = vpack.c.b16 %v200, %v200
    %v209 = vpack.c.b16 %v201, %v201
    %v210 = vpack.c.b16 %v202, %v202
    %v211 = vpack.c.b16 %v203, %v203
    %v212 = vpack.c.b16 %v204, %v204
    %v349 = vunpack.c.l.b16 %v65
    %v350 = vunpack.c.l.b16 %v66
    %v351 = vunpack.c.l.b16 %v67
    %v352 = vunpack.c.l.b16 %v68
    %v353 = vunpack.c.l.b16 %v69
    %v354 = vunpack.c.l.b16 %v70
    %v355 = vunpack.c.l.b16 %v71
    %v356 = vunpack.c.l.b16 %v72
    %v357 = vunpack.c.l.b16 %v73
    %v358 = vunpack.c.l.b16 %v74
    %v359 = vunpack.c.l.b16 %v75
    %v360 = vunpack.c.l.b16 %v76
    %v361 = vunpack.c.l.b16 %v77
    %v362 = vunpack.c.l.b16 %v78
    %v363 = vunpack.c.l.b16 %v79
    %v364 = vunpack.c.l.b16 %v80
    %v365 = vunpack.c.l.b16 %v81
    %v366 = vunpack.c.l.b16 %v82
    %v367 = vunpack.c.l.b16 %v83
    %v368 = vunpack.c.l.b16 %v84
    %v369 = vunpack.c.l.b16 %v85
    %v370 = vunpack.c.l.b16 %v86
    %v371 = vunpack.c.l.b16 %v87
    %v372 = vunpack.c.l.b16 %v88
    %v373 = vunpack.c.l.b16 %v89
    %v374 = vunpack.c.l.b16 %v90
    %v375 = vunpack.c.l.b16 %v91
    %v376 = vunpack.c.l.b16 %v92
    %v377 = vunpack.c.l.b16 %v93
    %v378 = vunpack.c.l.b16 %v94
    %v379 = vunpack.c.l.b16 %v95
    %v380 = vunpack.c.l.b16 %v96
    %v381 = vunpack.c.l.b16 %v97
    %v382 = vunpack.c.l.b16 %v98
    %v383 = vunpack.c.l.b16 %v99
    %v384 = vunpack.c.l.b16 %v100
    %v385 = vunpack.c.l.b16 %v101
    %v386 = vunpack.c.l.b16 %v102
    %v387 = vunpack.c.l.b16 %v103
    %v388 = vunpack.c.l.b16 %v104
    %v389 = vunpack.c.l.b16 %v105
    %v390 = vunpack.c.l.b16 %v106
    %v391 = vunpack.c.l.b16 %v107
    %v392 = vunpack.c.l.b16 %v108
    %v393 = vunpack.c.l.b16 %v109
    %v394 = vunpack.c.l.b16 %v110
    %v395 = vunpack.c.l.b16 %v111
    %v396 = vunpack.c.l.b16 %v112
    %v397 = vunpack.c.l.b16 %v113
    %v398 = vunpack.c.l.b16 %v114
    %v399 = vunpack.c.l.b16 %v115
    %v400 = vunpack.c.l.b16 %v116
    %v401 = vunpack.c.l.b16 %v117
    %v402 = vunpack.c.l.b16 %v118
    %v403 = vunpack.c.l.b16 %v119
    %v404 = vunpack.c.l.b16 %v120
    %v405 = vunpack.c.l.b16 %v121
    %v406 = vunpack.c.l.b16 %v122
    %v407 = vunpack.c.l.b16 %v123
    %v408 = vunpack.c.l.b16 %v124
    %v409 = vunpack.c.l.b16 %v125
    %v410 = vunpack.c.l.b16 %v126
    %v411 = vunpack.c.l.b16 %v127
    %v412 = vunpack.c.l.b16 %v128
    %v413 = vunpack.c.l.b16 %v129
    %v414 = vunpack.c.l.b16 %v130
    %v415 = vunpack.c.l.b16 %v131
    %v416 = vunpack.c.l.b16 %v132
    %v417 = vunpack.c.l.b16 %v133
    %v418 = vunpack.c.l.b16 %v134
    %v419 = vunpack.c.l.b16 %v135
    %v420 = vunpack.c.l.b16 %v136
    %v421 = vunpack.c.l.b16 %v137
    %v422 = vunpack.c.l.b16 %v138
    %v423 = vunpack.c.l.b16 %v139
    %v424 = vunpack.c.l.b16 %v140
    %v425 = vunpack.c.l.b16 %v141
    %v426 = vunpack.c.l.b16 %v142
    %v427 = vunpack.c.l.b16 %v143
    %v428 = vunpack.c.l.b16 %v144
    %v429 = vunpack.c.l.b16 %v145
    %v430 = vunpack.c.l.b16 %v146
    %v431 = vunpack.c.l.b16 %v147
    %v432 = vunpack.c.l.b16 %v148
    %v433 = vunpack.c.l.b16 %v149
    %v434 = vunpack.c.l.b16 %v150
    %v435 = vunpack.c.l.b16 %v151
    %v436 = vunpack.c.l.b16 %v152
    %v437 = vunpack.c.l.b16 %v153
    %v438 = vunpack.c.l.b16 %v154
    %v439 = vunpack.c.l.b16 %v155
    %v440 = vunpack.c.l.b16 %v156
    %v441 = vunpack.c.l.b16 %v157
    %v442 = vunpack.c.l.b16 %v158
    %v443 = vunpack.c.l.b16 %v159
    %v444 = vunpack.c.l.b16 %v160
    %v445 = vunpack.c.l.b16 %v161
    %v446 = vunpack.c.l.b16 %v162
    %v447 = vunpack.c.l.b16 %v163
    %v448 = vunpack.c.l.b16 %v164
    %v449 = vunpack.c.l.b16 %v165
    %v450 = vunpack.c.l.b16 %v166
    %v451 = vunpack.c.l.b16 %v167
    %v452 = vunpack.c.l.b16 %v168
    %v453 = vunpack.c.l.b16 %v169
    %v454 = vunpack.c.l.b16 %v170
    %v455 = vunpack.c.l.b16 %v171
    %v456 = vunpack.c.l.b16 %v172
    %v457 = vunpack.c.l.b16 %v173
    %v458 = vunpack.c.l.b16 %v174
    %v459 = vunpack.c.l.b16 %v175
    %v460 = vunpack.c.l.b16 %v176
    %v461 = vunpack.c.l.b16 %v177
    %v462 = vunpack.c.l.b16 %v178
    %v463 = vunpack.c.l.b16 %v179
    %v464 = vunpack.c.l.b16 %v180
    %v465 = vunpack.c.l.b16 %v181
    %v466 = vunpack.c.l.b16 %v182
    %v467 = vunpack.c.l.b16 %v183
    %v468 = vunpack.c.l.b16 %v184
    %v469 = vunpack.c.l.b16 %v185
    %v470 = vunpack.c.l.b16 %v186
    %v471 = vunpack.c.l.b16 %v187
    %v472 = vunpack.c.l.b16 %v188
    %v473 = vunpack.c.l.b16 %v189
    %v474 = vunpack.c.l.b16 %v190
    %v475 = vunpack.c.l.b16 %v191
    %v476 = vunpack.c.l.b16 %v192
    %v477 = vpack.c.b16 %v350, %v349
    %v478 = vpack.c.b16 %v352, %v351
    %v479 = vpack.c.b16 %v354, %v353
    %v480 = vpack.c.b16 %v356, %v355
    %v481 = vpack.c.b16 %v358, %v357
    %v482 = vpack.c.b16 %v360, %v359
    %v483 = vpack.c.b16 %v362, %v361
    %v484 = vpack.c.b16 %v364, %v363
    %v485 = vpack.c.b16 %v366, %v365
    %v486 = vpack.c.b16 %v368, %v367
    %v487 = vpack.c.b16 %v370, %v369
    %v488 = vpack.c.b16 %v372, %v371
    %v489 = vpack.c.b16 %v374, %v373
    %v490 = vpack.c.b16 %v376, %v375
    %v491 = vpack.c.b16 %v378, %v377
    %v492 = vpack.c.b16 %v380, %v379
    %v493 = vpack.c.b16 %v382, %v381
    %v494 = vpack.c.b16 %v384, %v383
    %v495 = vpack.c.b16 %v386, %v385
    %v496 = vpack.c.b16 %v388, %v387
    %v497 = vpack.c.b16 %v390, %v389
    %v498 = vpack.c.b16 %v392, %v391
    %v499 = vpack.c.b16 %v394, %v393
    %v500 = vpack.c.b16 %v396, %v395
    %v501 = vpack.c.b16 %v398, %v397
    %v502 = vpack.c.b16 %v400, %v399
    %v503 = vpack.c.b16 %v402, %v401
    %v504 = vpack.c.b16 %v404, %v403
    %v505 = vpack.c.b16 %v406, %v405
    %v506 = vpack.c.b16 %v408, %v407
    %v507 = vpack.c.b16 %v410, %v409
    %v508 = vpack.c.b16 %v412, %v411
    %v509 = vpack.c.b16 %v414, %v413
    %v510 = vpack.c.b16 %v416, %v415
    %v511 = vpack.c.b16 %v418, %v417
    %v512 = vpack.c.b16 %v420, %v419
    %v513 = vpack.c.b16 %v422, %v421
    %v514 = vpack.c.b16 %v424, %v423
    %v515 = vpack.c.b16 %v426, %v425
    %v516 = vpack.c.b16 %v428, %v427
    %v517 = vpack.c.b16 %v430, %v429
    %v518 = vpack.c.b16 %v432, %v431
    %v519 = vpack.c.b16 %v434, %v433
    %v520 = vpack.c.b16 %v436, %v435
    %v521 = vpack.c.b16 %v438, %v437
    %v522 = vpack.c.b16 %v440, %v439
    %v523 = vpack.c.b16 %v442, %v441
    %v524 = vpack.c.b16 %v444, %v443
    %v525 = vpack.c.b16 %v446, %v445
    %v526 = vpack.c.b16 %v448, %v447
    %v527 = vpack.c.b16 %v450, %v449
    %v528 = vpack.c.b16 %v452, %v451
    %v529 = vpack.c.b16 %v454, %v453
    %v530 = vpack.c.b16 %v456, %v455
    %v531 = vpack.c.b16 %v458, %v457
    %v532 = vpack.c.b16 %v460, %v459
    %v533 = vpack.c.b16 %v462, %v461
    %v534 = vpack.c.b16 %v464, %v463
    %v535 = vpack.c.b16 %v466, %v465
    %v536 = vpack.c.b16 %v468, %v467
    %v537 = vpack.c.b16 %v470, %v469
    %v538 = vpack.c.b16 %v472, %v471
    %v539 = vpack.c.b16 %v474, %v473
    %v540 = vpack.c.b16 %v476, %v475
    %605 = vmatprep.subr.bf16.mxu0 0
    %606 = vmatpush1.bf16.msra.mxu0 %v477
    %607 = vmatprep.subr.bf16.mxu0 0
    %608 = vmatpush1.bf16.msra.mxu0 %v478
    %609 = vmatprep.subr.bf16.mxu0 0
    %610 = vmatpush1.bf16.msra.mxu0 %v479
    %611 = vmatprep.subr.bf16.mxu0 0
    %612 = vmatpush1.bf16.msra.mxu0 %v480
    %613 = vmatprep.subr.bf16.mxu0 0
    %614 = vmatpush1.bf16.msra.mxu0 %v481
    %615 = vmatprep.subr.bf16.mxu0 0
    %616 = vmatpush1.bf16.msra.mxu0 %v482
    %617 = vmatprep.subr.bf16.mxu0 0
    %618 = vmatpush1.bf16.msra.mxu0 %v483
    %619 = vmatprep.subr.bf16.mxu0 0
    %620 = vmatpush1.bf16.msra.mxu0 %v484
    %621 = vmatprep.subr.bf16.mxu0 0
    %622 = vmatpush1.bf16.msra.mxu0 %v485
    %623 = vmatprep.subr.bf16.mxu0 0
    %624 = vmatpush1.bf16.msra.mxu0 %v486
    %625 = vmatprep.subr.bf16.mxu0 0
    %626 = vmatpush1.bf16.msra.mxu0 %v487
    %627 = vmatprep.subr.bf16.mxu0 0
    %628 = vmatpush1.bf16.msra.mxu0 %v488
    %629 = vmatprep.subr.bf16.mxu0 0
    %630 = vmatpush1.bf16.msra.mxu0 %v489
    %631 = vmatprep.subr.bf16.mxu0 0
    %632 = vmatpush1.bf16.msra.mxu0 %v490
    %633 = vmatprep.subr.bf16.mxu0 0
    %634 = vmatpush1.bf16.msra.mxu0 %v491
    %635 = vmatprep.subr.bf16.mxu0 0
    %636 = vmatpush1.bf16.msra.mxu0 %v492
    %637 = vmatprep.mubr.bf16.mxu0 %v206
    %638 = vmatmul.mubr.bf16.gmra.mrb[0].mxu0 %v205
    %v639 = vpop.f32.mrb[0].mxu0
    %v640 = vadd.f32 0.0, %v639
    %v641 = vpop.f32.mrb[0].mxu0
    %v642 = vpop.f32.mrb[0].mxu0
    %v643 = vpop.f32.mrb[0].mxu0
    %644 = vdwg.mxu0
    %645 = vmatprep.subr.bf16.mxu0 0
    %646 = vmatpush1.bf16.msra.mxu0 %v493
    %647 = vmatprep.subr.bf16.mxu0 0
    %648 = vmatpush1.bf16.msra.mxu0 %v494
    %649 = vmatprep.subr.bf16.mxu0 0
    %650 = vmatpush1.bf16.msra.mxu0 %v495
    %651 = vmatprep.subr.bf16.mxu0 0
    %652 = vmatpush1.bf16.msra.mxu0 %v496
    %653 = vmatprep.subr.bf16.mxu0 0
    %654 = vmatpush1.bf16.msra.mxu0 %v497
    %655 = vmatprep.subr.bf16.mxu0 0
    %656 = vmatpush1.bf16.msra.mxu0 %v498
    %657 = vmatprep.subr.bf16.mxu0 0
    %658 = vmatpush1.bf16.msra.mxu0 %v499
    %659 = vmatprep.subr.bf16.mxu0 0
    %660 = vmatpush1.bf16.msra.mxu0 %v500
    %661 = vmatprep.subr.bf16.mxu0 0
    %662 = vmatpush1.bf16.msra.mxu0 %v501
    %663 = vmatprep.subr.bf16.mxu0 0
    %664 = vmatpush1.bf16.msra.mxu0 %v502
    %665 = vmatprep.subr.bf16.mxu0 0
    %666 = vmatpush1.bf16.msra.mxu0 %v503
    %667 = vmatprep.subr.bf16.mxu0 0
    %668 = vmatpush1.bf16.msra.mxu0 %v504
    %669 = vmatprep.subr.bf16.mxu0 0
    %670 = vmatpush1.bf16.msra.mxu0 %v505
    %671 = vmatprep.subr.bf16.mxu0 0
    %672 = vmatpush1.bf16.msra.mxu0 %v506
    %673 = vmatprep.subr.bf16.mxu0 0
    %674 = vmatpush1.bf16.msra.mxu0 %v507
    %675 = vmatprep.subr.bf16.mxu0 0
    %676 = vmatpush1.bf16.msra.mxu0 %v508
    %677 = vmatprep.mubr.bf16.mxu0 %v208
    %678 = vmatmul.mubr.bf16.gmra.mrb[0].mxu0 %v207
    %v679 = vpop.f32.mrb[0].mxu0
    %v680 = vadd.f32 %v640, %v679
    %v681 = vpop.f32.mrb[0].mxu0
    %v682 = vpop.f32.mrb[0].mxu0
    %v683 = vpop.f32.mrb[0].mxu0
    %684 = vdwg.mxu0
    %685 = vmatprep.subr.bf16.mxu0 0
    %686 = vmatpush1.bf16.msra.mxu0 %v509
    %687 = vmatprep.subr.bf16.mxu0 0
    %688 = vmatpush1.bf16.msra.mxu0 %v510
    %689 = vmatprep.subr.bf16.mxu0 0
    %690 = vmatpush1.bf16.msra.mxu0 %v511
    %691 = vmatprep.subr.bf16.mxu0 0
    %692 = vmatpush1.bf16.msra.mxu0 %v512
    %693 = vmatprep.subr.bf16.mxu0 0
    %694 = vmatpush1.bf16.msra.mxu0 %v513
    %695 = vmatprep.subr.bf16.mxu0 0
    %696 = vmatpush1.bf16.msra.mxu0 %v514
    %697 = vmatprep.subr.bf16.mxu0 0
    %698 = vmatpush1.bf16.msra.mxu0 %v515
    %699 = vmatprep.subr.bf16.mxu0 0
    %700 = vmatpush1.bf16.msra.mxu0 %v516
    %701 = vmatprep.subr.bf16.mxu0 0
    %702 = vmatpush1.bf16.msra.mxu0 %v517
    %703 = vmatprep.subr.bf16.mxu0 0
    %704 = vmatpush1.bf16.msra.mxu0 %v518
    %705 = vmatprep.subr.bf16.mxu0 0
    %706 = vmatpush1.bf16.msra.mxu0 %v519
    %707 = vmatprep.subr.bf16.mxu0 0
    %708 = vmatpush1.bf16.msra.mxu0 %v520
    %709 = vmatprep.subr.bf16.mxu0 0
    %710 = vmatpush1.bf16.msra.mxu0 %v521
    %711 = vmatprep.subr.bf16.mxu0 0
    %712 = vmatpush1.bf16.msra.mxu0 %v522
    %713 = vmatprep.subr.bf16.mxu0 0
    %714 = vmatpush1.bf16.msra.mxu0 %v523
    %715 = vmatprep.subr.bf16.mxu0 0
    %716 = vmatpush1.bf16.msra.mxu0 %v524
    %717 = vmatprep.mubr.bf16.mxu0 %v210
    %718 = vmatmul.mubr.bf16.gmra.mrb[0].mxu0 %v209
    %v719 = vpop.f32.mrb[0].mxu0
    %v720 = vadd.f32 %v680, %v719
    %v721 = vpop.f32.mrb[0].mxu0
    %v722 = vpop.f32.mrb[0].mxu0
    %v723 = vpop.f32.mrb[0].mxu0
    %724 = vdwg.mxu0
    %725 = vmatprep.subr.bf16.mxu0 0
    %726 = vmatpush1.bf16.msra.mxu0 %v525
    %727 = vmatprep.subr.bf16.mxu0 0
    %728 = vmatpush1.bf16.msra.mxu0 %v526
    %729 = vmatprep.subr.bf16.mxu0 0
    %730 = vmatpush1.bf16.msra.mxu0 %v527
    %731 = vmatprep.subr.bf16.mxu0 0
    %732 = vmatpush1.bf16.msra.mxu0 %v528
    %733 = vmatprep.subr.bf16.mxu0 0
    %734 = vmatpush1.bf16.msra.mxu0 %v529
    %735 = vmatprep.subr.bf16.mxu0 0
    %736 = vmatpush1.bf16.msra.mxu0 %v530
    %737 = vmatprep.subr.bf16.mxu0 0
    %738 = vmatpush1.bf16.msra.mxu0 %v531
    %739 = vmatprep.subr.bf16.mxu0 0
    %740 = vmatpush1.bf16.msra.mxu0 %v532
    %741 = vmatprep.subr.bf16.mxu0 0
    %742 = vmatpush1.bf16.msra.mxu0 %v533
    %743 = vmatprep.subr.bf16.mxu0 0
    %744 = vmatpush1.bf16.msra.mxu0 %v534
    %745 = vmatprep.subr.bf16.mxu0 0
    %746 = vmatpush1.bf16.msra.mxu0 %v535
    %747 = vmatprep.subr.bf16.mxu0 0
    %748 = vmatpush1.bf16.msra.mxu0 %v536
    %749 = vmatprep.subr.bf16.mxu0 0
    %750 = vmatpush1.bf16.msra.mxu0 %v537
    %751 = vmatprep.subr.bf16.mxu0 0
    %752 = vmatpush1.bf16.msra.mxu0 %v538
    %753 = vmatprep.subr.bf16.mxu0 0
    %754 = vmatpush1.bf16.msra.mxu0 %v539
    %755 = vmatprep.subr.bf16.mxu0 0
    %756 = vmatpush1.bf16.msra.mxu0 %v540
    %757 = vmatprep.mubr.bf16.mxu0 %v212
    %758 = vmatmul.mubr.bf16.gmra.mrb[0].mxu0 %v211
    %v759 = vpop.f32.mrb[0].mxu0
    %v760 = vadd.f32 %v720, %v759
    %v761 = vpop.f32.mrb[0].mxu0
    %v762 = vpop.f32.mrb[0].mxu0
    %v763 = vpop.f32.mrb[0].mxu0
    %764 = vdwg.mxu0
    %p765 = scmp.eq.s32.totalorder 0, 0
    // Predicated region
    $region34: #{tpu_custom_call.1} parent=1 // pred_check
      %p766 = pneg %p765
    $region35: #{tpu_custom_call.1} parent=1 // pred_check_branch
      %768 = sbr.rel (%p766) target = $region37
    $region36: #{tpu_custom_call.1} parent=1 // pred_region
      %769 = vst [vmem:[#allocation2] sm:$0xff] %v760
    $region37: #{tpu_custom_call.1} parent=1 // pred_fallthru
      _
    %p770 = scmp.gt.s32.totalorder 0, 0
    // Predicated region
    $region38: #{tpu_custom_call.1} parent=1 // pred_check
      %p771 = pneg %p770
    $region39: #{tpu_custom_call.1} parent=1 // pred_check_branch
      %773 = sbr.rel (%p771) target = $region41
    $region40: #{tpu_custom_call.1} parent=1 // pred_region
      %v774 = vld [vmem:[#allocation2] sm:$0xff]
      %v775 = vadd.f32 %v774, %v760
      %776 = vst [vmem:[#allocation2] sm:$0xff] %v775
    $region41: #{tpu_custom_call.1} parent=1 // pred_fallthru
      _
    // Predicated region
    $region42: #{tpu_custom_call.1} parent=1 // pred_check
      %p777 = pneg %p765
    $region43: #{tpu_custom_call.1} parent=1 // pred_check_branch
      %779 = sbr.rel (%p777) target = $region45
    $region44: #{tpu_custom_call.1} parent=1 // pred_region
      %v780 = vld [vmem:[#allocation2] sm:$0xff]
      %v781 = vld [vmem:[%s2] sm:$0x1]
      %v783 = vlaneseq
      %v784 = vshrl.u32 %v783, 7
      %v785 = vsub.s32 0, %v784
      %v786 = vrot.slane %v781, %v785
      %v788 = vadd.f32 %v780, %v786
      %v789 = vmax.f32 %v788, 0.0
      %v790 = vpack.c.bf16 %v789, %v789
      %791 = vst [vmem:[#allocation3] sm:$0xf] %v790
      %v792 = vld [vmem:[#allocation3] sm:$0xf]
      %v793 = vld [vmem:[#allocation9] sm:$0xf]
      %v794 = vld [vmem:[#allocation9 + $0x4] sm:$0xf]
      %v795 = vld [vmem:[#allocation9 + $0x8] sm:$0xf]
      %v796 = vld [vmem:[#allocation9 + $0xc] sm:$0xf]
      %v797 = vld [vmem:[#allocation9 + $0x10] sm:$0xf]
      %v798 = vld [vmem:[#allocation9 + $0x14] sm:$0xf]
      %v799 = vld [vmem:[#allocation9 + $0x18] sm:$0xf]
      %v800 = vld [vmem:[#allocation9 + $0x1c] sm:$0xf]
      %v801 = vld [vmem:[#allocation9 + $0x20] sm:$0xf]
      %v802 = vld [vmem:[#allocation9 + $0x24] sm:$0xf]
      %v803 = vld [vmem:[#allocation9 + $0x28] sm:$0xf]
      %v804 = vld [vmem:[#allocation9 + $0x2c] sm:$0xf]
      %v805 = vld [vmem:[#allocation9 + $0x30] sm:$0xf]
      %v806 = vld [vmem:[#allocation9 + $0x34] sm:$0xf]
      %v807 = vld [vmem:[#allocation9 + $0x38] sm:$0xf]
      %v808 = vld [vmem:[#allocation9 + $0x3c] sm:$0xf]
      %v809 = vld [vmem:[%s4] sm:$0x1]
      %v811 = vlaneseq
      %v812 = vshrl.u32 %v811, 7
      %v813 = vsub.s32 0, %v812
      %v814 = vrot.slane %v809, %v813
      %v832 = vunpack.c.l.b16 %v793
      %v833 = vunpack.c.l.b16 %v794
      %v834 = vunpack.c.l.b16 %v795
      %v835 = vunpack.c.l.b16 %v796
      %v836 = vunpack.c.l.b16 %v797
      %v837 = vunpack.c.l.b16 %v798
      %v838 = vunpack.c.l.b16 %v799
      %v839 = vunpack.c.l.b16 %v800
      %v840 = vunpack.c.l.b16 %v801
      %v841 = vunpack.c.l.b16 %v802
      %v842 = vunpack.c.l.b16 %v803
      %v843 = vunpack.c.l.b16 %v804
      %v844 = vunpack.c.l.b16 %v805
      %v845 = vunpack.c.l.b16 %v806
      %v846 = vunpack.c.l.b16 %v807
      %v847 = vunpack.c.l.b16 %v808
      %v848 = vpack.c.b16 %v833, %v832
      %v849 = vpack.c.b16 %v835, %v834
      %v850 = vpack.c.b16 %v837, %v836
      %v851 = vpack.c.b16 %v839, %v838
      %v852 = vpack.c.b16 %v841, %v840
      %v853 = vpack.c.b16 %v843, %v842
      %v854 = vpack.c.b16 %v845, %v844
      %v855 = vpack.c.b16 %v847, %v846
      %864 = vmatprep.subr.bf16.mxu0 0
      %865 = vmatpush1.bf16.msra.mxu0 %v848
      %866 = vmatprep.subr.bf16.mxu0 0
      %867 = vmatpush1.bf16.msra.mxu0 %v849
      %868 = vmatprep.subr.bf16.mxu0 0
      %869 = vmatpush1.bf16.msra.mxu0 %v850
      %870 = vmatprep.subr.bf16.mxu0 0
      %871 = vmatpush1.bf16.msra.mxu0 %v851
      %872 = vmatprep.subr.bf16.mxu0 0
      %873 = vmatpush1.bf16.msra.mxu0 %v852
      %874 = vmatprep.subr.bf16.mxu0 0
      %875 = vmatpush1.bf16.msra.mxu0 %v853
      %876 = vmatprep.subr.bf16.mxu0 0
      %877 = vmatpush1.bf16.msra.mxu0 %v854
      %878 = vmatprep.subr.bf16.mxu0 0
      %879 = vmatpush1.bf16.msra.mxu0 %v855
      %880 = vmatprep.subr.bf16.mxu0 0
      %881 = vmatpush1.bf16.msra.mxu0 0
      %882 = vmatprep.subr.bf16.mxu0 0
      %883 = vmatpush1.bf16.msra.mxu0 0
      %884 = vmatprep.subr.bf16.mxu0 0
      %885 = vmatpush1.bf16.msra.mxu0 0
      %886 = vmatprep.subr.bf16.mxu0 0
      %887 = vmatpush1.bf16.msra.mxu0 0
      %888 = vmatprep.subr.bf16.mxu0 0
      %889 = vmatpush1.bf16.msra.mxu0 0
      %890 = vmatprep.subr.bf16.mxu0 0
      %891 = vmatpush1.bf16.msra.mxu0 0
      %892 = vmatprep.subr.bf16.mxu0 0
      %893 = vmatpush1.bf16.msra.mxu0 0
      %894 = vmatprep.subr.bf16.mxu0 0
      %895 = vmatpush1.bf16.msra.mxu0 0
      %896 = vmatprep.mubr.bf16.mxu0 0
      %897 = vmatmul.mubr.bf16.gmra.mrb[0].mxu0 %v792
      %v898 = vpop.f32.mrb[0].mxu0
      %v899 = vadd.f32 %v814, %v898
      %v900 = vpop.f32.mrb[0].mxu0
      %v901 = vpop.f32.mrb[0].mxu0
      %v902 = vpop.f32.mrb[0].mxu0
      %903 = vdwg.mxu0
      %v904 = vmax.f32 %v899, 0.0
      %v905 = vpack.c.bf16 %v904, %v904
      %906 = vst [vmem:[#allocation10] sm:$0xf] %v905
    $region45: #{tpu_custom_call.1} parent=1 // pred_fallthru
      _
    // Predicated region
    $region46: #{tpu_custom_call.1} parent=1 // pred_check
      _
    $region47: #{tpu_custom_call.1} parent=1 // pred_check_branch
      %908 = sbr.rel (0) target = $region49
    $region48: #{tpu_custom_call.1} parent=1 // pred_region
      %s910 = ssub.s32 64, 64
      %911 = vsyncadd [#allocation6], %s910
      %s913 = sshll.u32 [#allocation10], 4
      %s914 = int_to_ptr.vmem [resolvable:$true] %s913
      %916 = dma.vmem_to_hbm [thread:$0]  %s914, 64, %s5, [#allocation6]
    $region49: #{tpu_custom_call.1} parent=1 // pred_fallthru
      _
    // Predicated region
    $region50: #{tpu_custom_call.1} parent=1 // pred_check
      _
    $region51: #{tpu_custom_call.1} parent=1 // pred_check_branch
      %918 = sbr.rel (0) target = $region53
    $region52: #{tpu_custom_call.1} parent=1 // pred_region
      %919 = dma.done [#allocation6], 64
    $region53: #{tpu_custom_call.1} parent=1 // pred_fallthru
      _
    %920 = vsyncpa [#allocation5], 1
    %921 = vsyncpa [#allocation8], 1
    %922 = vsyncpa [#allocation6], 1

// kernel: tpu_custom_call.1
$region0: #{tpu_custom_call.1}
  #allocation0 [shape = 'u32[]', space=smem, size = 0x4, offset = 0x4, fixed_abs, tag = 'smem constant byte address 0x4 - core index']
  #allocation1 [shape = 'u32[144,128]{1,0:T(1,128)}', space=vmem, size = 0x12000, scoped, tag = 'internal scratch']
  #allocation2 [shape = 'f32[8,128]{1,0:T(8,128)}', space=vmem, size = 0x1000, scoped, tag = 'scratch operand']
  #allocation3 [shape = 'bf16[8,128]{1,0:T(8,128)(2,1)}', space=vmem, size = 0x800, scoped, tag = 'scratch operand']
  %s0 = inlined_call_operand.hbm [shape: bf16[8,1024], index: 0, kind: input, shape index: {}]
  %s1 = inlined_call_operand.hbm [shape: bf16[1024,128], index: 1, kind: input, shape index: {}]
  %s2 = inlined_call_operand.vmem [shape: f32[1,128], index: 2, kind: input, shape index: {}]
  %s3 = inlined_call_operand.hbm [shape: bf16[128,128], index: 3, kind: input, shape index: {}]
  %s4 = inlined_call_operand.vmem [shape: f32[1,128], index: 4, kind: input, shape index: {}]
  %s5 = inlined_call_operand.hbm [shape: bf16[8,128], index: 5, kind: output, shape index: {}]
  %s6 = sld [smem:[#allocation0]]
  $region54: #{tpu_custom_call.1} parent=0
    _
  %s8 = ssub.s32 1, %s6
  %s9 = scalar_select 0, %s8, %s6
  $region1: #{tpu_custom_call.1} parent=0
    #allocation4 [shape = 'u8[16384]{0}', space=vmem, size = 0x4000, scoped, tag = 'input window, operand 0, single buffered']
    #allocation5 [shape = 's32[1]{0}', space=sflag, size = 0x4, scoped, tag = 'scoped memory for tpu_custom_call.1']
    #allocation6 [shape = 's32[1]{0}', space=sflag, size = 0x4, scoped, tag = 'scoped memory for tpu_custom_call.1']
    #allocation7 [shape = 'u8[262144]{0}', space=vmem, size = 0x40000, scoped, tag = 'input window, operand 1, single buffered']
    #allocation8 [shape = 's32[1]{0}', space=sflag, size = 0x4, scoped, tag = 'scoped memory for tpu_custom_call.1']
    #allocation9 [shape = 'u8[32768]{0}', space=vmem, size = 0x8000, scoped, tag = 'input window, operand 3, single buffered']
    #allocation10 [shape = 'u8[2048]{0}', space=vmem, size = 0x800, scoped, tag = 'output window, operand 0, single buffered']
    %10 = vsyncpa [#allocation5], 0
    %11 = vsyncpa [#allocation8], 0
    %12 = vsyncpa [#allocation6], 0
    // Predicated region
    $region2: #{tpu_custom_call.1} parent=1 // pred_check
      _
    $region3: #{tpu_custom_call.1} parent=1 // pred_check_branch
      %14 = sbr.rel (0) target = $region5
    $region4: #{tpu_custom_call.1} parent=1 // pred_region
      %s16 = ssub.s32 512, 512
      %17 = vsyncadd [#allocation5], %s16
      %s19 = sshll.u32 [#allocation4], 4
      %s20 = int_to_ptr.vmem [resolvable:$true] %s19
      %22 = dma.hbm_to_vmem [thread:$0]  %s0, 512, %s20, [#allocation5]
    $region5: #{tpu_custom_call.1} parent=1 // pred_fallthru
      _
    // Predicated region
    $region6: #{tpu_custom_call.1} parent=1 // pred_check
      _
    $region7: #{tpu_custom_call.1} parent=1 // pred_check_branch
      %24 = sbr.rel (0) target = $region9
    $region8: #{tpu_custom_call.1} parent=1 // pred_region
      %s26 = ssub.s32 8192, 8192
      %27 = vsyncadd [#allocation8], %s26
      %s28 = sshll.u32 [#allocation7], 4
      %s29 = int_to_ptr.vmem [resolvable:$true] %s28
      %34 = dma.hbm_to_vmem [thread:$0]  %s1, 8192, %s29, [#allocation8], 64, 64, 4
    $region9: #{tpu_custom_call.1} parent=1 // pred_fallthru
      _
    // Predicated region
    $region10: #{tpu_custom_call.1} parent=1 // pred_check
      _
    $region11: #{tpu_custom_call.1} parent=1 // pred_check_branch
      %36 = sbr.rel (0) target = $region13
    $region12: #{tpu_custom_call.1} parent=1 // pred_region
      _
    $region13: #{tpu_custom_call.1} parent=1 // pred_fallthru
      _
    // Predicated region
    $region14: #{tpu_custom_call.1} parent=1 // pred_check
      _
    $region15: #{tpu_custom_call.1} parent=1 // pred_check_branch
      %38 = sbr.rel (0) target = $region17
    $region16: #{tpu_custom_call.1} parent=1 // pred_region
      %s40 = ssub.s32 1024, 1024
      %41 = vsyncadd [#allocation8], %s40
      %s42 = sshll.u32 [#allocation9], 4
      %s43 = int_to_ptr.vmem [resolvable:$true] %s42
      %48 = dma.hbm_to_vmem [thread:$0]  %s3, 1024, %s43, [#allocation8], 64, 64, 4
    $region17: #{tpu_custom_call.1} parent=1 // pred_fallthru
      _
    // Predicated region
    $region18: #{tpu_custom_call.1} parent=1 // pred_check
      _
    $region19: #{tpu_custom_call.1} parent=1 // pred_check_branch
      %50 = sbr.rel (0) target = $region21
    $region20: #{tpu_custom_call.1} parent=1 // pred_region
      _
    $region21: #{tpu_custom_call.1} parent=1 // pred_fallthru
      _
    // Predicated region
    $region22: #{tpu_custom_call.1} parent=1 // pred_check
      _
    $region23: #{tpu_custom_call.1} parent=1 // pred_check_branch
      %52 = sbr.rel (0) target = $region25
    $region24: #{tpu_custom_call.1} parent=1 // pred_region
      %53 = dma.done [#allocation5], 512
    $region25: #{tpu_custom_call.1} parent=1 // pred_fallthru
      _
    // Predicated region
    $region26: #{tpu_custom_call.1} parent=1 // pred_check
      _
    $region27: #{tpu_custom_call.1} parent=1 // pred_check_branch
      %55 = sbr.rel (0) target = $region29
    $region28: #{tpu_custom_call.1} parent=1 // pred_region
      %56 = dma.done [#allocation8], 8192
    $region29: #{tpu_custom_call.1} parent=1 // pred_fallthru
      _
    // Predicated region
    $region30: #{tpu_custom_call.1} parent=1 // pred_check
      _
    $region31: #{tpu_custom_call.1} parent=1 // pred_check_branch
      %58 = sbr.rel (0) target = $region33
    $region32: #{tpu_custom_call.1} parent=1 // pred_region
      %59 = dma.done [#allocation8], 1024
    $region33: #{tpu_custom_call.1} parent=1 // pred_fallthru
      _
    %v61 = vld [vmem:[#allocation4] sm:$0xff]
    %v62 = vld [vmem:[#allocation4 + $0x8] sm:$0xff]
    %v63 = vld [vmem:[#allocation4 + $0x10] sm:$0xff]
    %v64 = vld [vmem:[#allocation4 + $0x18] sm:$0xff]
    %v65 = vld [vmem:[#allocation7] sm:$0xf]
    %v66 = vld [vmem:[#allocation7 + $0x4] sm:$0xf]
    %v67 = vld [vmem:[#allocation7 + $0x8] sm:$0xf]
    %v68 = vld [vmem:[#allocation7 + $0xc] sm:$0xf]
    %v69 = vld [vmem:[#allocation7 + $0x10] sm:$0xf]
    %v70 = vld [vmem:[#allocation7 + $0x14] sm:$0xf]
    %v71 = vld [vmem:[#allocation7 + $0x18] sm:$0xf]
    %v72 = vld [vmem:[#allocation7 + $0x1c] sm:$0xf]
    %v73 = vld [vmem:[#allocation7 + $0x20] sm:$0xf]
    %v74 = vld [vmem:[#allocation7 + $0x24] sm:$0xf]
    %v75 = vld [vmem:[#allocation7 + $0x28] sm:$0xf]
    %v76 = vld [vmem:[#allocation7 + $0x2c] sm:$0xf]
    %v77 = vld [vmem:[#allocation7 + $0x30] sm:$0xf]
    %v78 = vld [vmem:[#allocation7 + $0x34] sm:$0xf]
    %v79 = vld [vmem:[#allocation7 + $0x38] sm:$0xf]
    %v80 = vld [vmem:[#allocation7 + $0x3c] sm:$0xf]
    %v81 = vld [vmem:[#allocation7 + $0x40] sm:$0xf]
    %v82 = vld [vmem:[#allocation7 + $0x44] sm:$0xf]
    %v83 = vld [vmem:[#allocation7 + $0x48] sm:$0xf]
    %v84 = vld [vmem:[#allocation7 + $0x4c] sm:$0xf]
    %v85 = vld [vmem:[#allocation7 + $0x50] sm:$0xf]
    %v86 = vld [vmem:[#allocation7 + $0x54] sm:$0xf]
    %v87 = vld [vmem:[#allocation7 + $0x58] sm:$0xf]
    %v88 = vld [vmem:[#allocation7 + $0x5c] sm:$0xf]
    %v89 = vld [vmem:[#allocation7 + $0x60] sm:$0xf]
    %v90 = vld [vmem:[#allocation7 + $0x64] sm:$0xf]
    %v91 = vld [vmem:[#allocation7 + $0x68] sm:$0xf]
    %v92 = vld [vmem:[#allocation7 + $0x6c] sm:$0xf]
    %v93 = vld [vmem:[#allocation7 + $0x70] sm:$0xf]
    %v94 = vld [vmem:[#allocation7 + $0x74] sm:$0xf]
    %v95 = vld [vmem:[#allocation7 + $0x78] sm:$0xf]
    %v96 = vld [vmem:[#allocation7 + $0x7c] sm:$0xf]
    %v97 = vld [vmem:[#allocation7 + $0x80] sm:$0xf]
    %v98 = vld [vmem:[#allocation7 + $0x84] sm:$0xf]
    %v99 = vld [vmem:[#allocation7 + $0x88] sm:$0xf]
    %v100 = vld [vmem:[#allocation7 + $0x8c] sm:$0xf]
    %v101 = vld [vmem:[#allocation7 + $0x90] sm:$0xf]
    %v102 = vld [vmem:[#allocation7 + $0x94] sm:$0xf]
    %v103 = vld [vmem:[#allocation7 + $0x98] sm:$0xf]
    %v104 = vld [vmem:[#allocation7 + $0x9c] sm:$0xf]
    %v105 = vld [vmem:[#allocation7 + $0xa0] sm:$0xf]
    %v106 = vld [vmem:[#allocation7 + $0xa4] sm:$0xf]
    %v107 = vld [vmem:[#allocation7 + $0xa8] sm:$0xf]
    %v108 = vld [vmem:[#allocation7 + $0xac] sm:$0xf]
    %v109 = vld [vmem:[#allocation7 + $0xb0] sm:$0xf]
    %v110 = vld [vmem:[#allocation7 + $0xb4] sm:$0xf]
    %v111 = vld [vmem:[#allocation7 + $0xb8] sm:$0xf]
    %v112 = vld [vmem:[#allocation7 + $0xbc] sm:$0xf]
    %v113 = vld [vmem:[#allocation7 + $0xc0] sm:$0xf]
    %v114 = vld [vmem:[#allocation7 + $0xc4] sm:$0xf]
    %v115 = vld [vmem:[#allocation7 + $0xc8] sm:$0xf]
    %v116 = vld [vmem:[#allocation7 + $0xcc] sm:$0xf]
    %v117 = vld [vmem:[#allocation7 + $0xd0] sm:$0xf]
    %v118 = vld [vmem:[#allocation7 + $0xd4] sm:$0xf]
    %v119 = vld [vmem:[#allocation7 + $0xd8] sm:$0xf]
    %v120 = vld [vmem:[#allocation7 + $0xdc] sm:$0xf]
    %v121 = vld [vmem:[#allocation7 + $0xe0] sm:$0xf]
    %v122 = vld [vmem:[#allocation7 + $0xe4] sm:$0xf]
    %v123 = vld [vmem:[#allocation7 + $0xe8] sm:$0xf]
    %v124 = vld [vmem:[#allocation7 + $0xec] sm:$0xf]
    %v125 = vld [vmem:[#allocation7 + $0xf0] sm:$0xf]
    %v126 = vld [vmem:[#allocation7 + $0xf4] sm:$0xf]
    %v127 = vld [vmem:[#allocation7 + $0xf8] sm:$0xf]
    %v128 = vld [vmem:[#allocation7 + $0xfc] sm:$0xf]
    %v129 = vld [vmem:[#allocation7 + $0x100] sm:$0xf]
    %v130 = vld [vmem:[#allocation7 + $0x104] sm:$0xf]
    %v131 = vld [vmem:[#allocation7 + $0x108] sm:$0xf]
    %v132 = vld [vmem:[#allocation7 + $0x10c] sm:$0xf]
    %v133 = vld [vmem:[#allocation7 + $0x110] sm:$0xf]
    %v134 = vld [vmem:[#allocation7 + $0x114] sm:$0xf]
    %v135 = vld [vmem:[#allocation7 + $0x118] sm:$0xf]
    %v136 = vld [vmem:[#allocation7 + $0x11c] sm:$0xf]
    %v137 = vld [vmem:[#allocation7 + $0x120] sm:$0xf]
    %v138 = vld [vmem:[#allocation7 + $0x124] sm:$0xf]
    %v139 = vld [vmem:[#allocation7 + $0x128] sm:$0xf]
    %v140 = vld [vmem:[#allocation7 + $0x12c] sm:$0xf]
    %v141 = vld [vmem:[#allocation7 + $0x130] sm:$0xf]
    %v142 = vld [vmem:[#allocation7 + $0x134] sm:$0xf]
    %v143 = vld [vmem:[#allocation7 + $0x138] sm:$0xf]
    %v144 = vld [vmem:[#allocation7 + $0x13c] sm:$0xf]
    %v145 = vld [vmem:[#allocation7 + $0x140] sm:$0xf]
    %v146 = vld [vmem:[#allocation7 + $0x144] sm:$0xf]
    %v147 = vld [vmem:[#allocation7 + $0x148] sm:$0xf]
    %v148 = vld [vmem:[#allocation7 + $0x14c] sm:$0xf]
    %v149 = vld [vmem:[#allocation7 + $0x150] sm:$0xf]
    %v150 = vld [vmem:[#allocation7 + $0x154] sm:$0xf]
    %v151 = vld [vmem:[#allocation7 + $0x158] sm:$0xf]
    %v152 = vld [vmem:[#allocation7 + $0x15c] sm:$0xf]
    %v153 = vld [vmem:[#allocation7 + $0x160] sm:$0xf]
    %v154 = vld [vmem:[#allocation7 + $0x164] sm:$0xf]
    %v155 = vld [vmem:[#allocation7 + $0x168] sm:$0xf]
    %v156 = vld [vmem:[#allocation7 + $0x16c] sm:$0xf]
    %v157 = vld [vmem:[#allocation7 + $0x170] sm:$0xf]
    %v158 = vld [vmem:[#allocation7 + $0x174] sm:$0xf]
    %v159 = vld [vmem:[#allocation7 + $0x178] sm:$0xf]
    %v160 = vld [vmem:[#allocation7 + $0x17c] sm:$0xf]
    %v161 = vld [vmem:[#allocation7 + $0x180] sm:$0xf]
    %v162 = vld [vmem:[#allocation7 + $0x184] sm:$0xf]
    %v163 = vld [vmem:[#allocation7 + $0x188] sm:$0xf]
    %v164 = vld [vmem:[#allocation7 + $0x18c] sm:$0xf]
    %v165 = vld [vmem:[#allocation7 + $0x190] sm:$0xf]
    %v166 = vld [vmem:[#allocation7 + $0x194] sm:$0xf]
    %v167 = vld [vmem:[#allocation7 + $0x198] sm:$0xf]
    %v168 = vld [vmem:[#allocation7 + $0x19c] sm:$0xf]
    %v169 = vld [vmem:[#allocation7 + $0x1a0] sm:$0xf]
    %v170 = vld [vmem:[#allocation7 + $0x1a4] sm:$0xf]
    %v171 = vld [vmem:[#allocation7 + $0x1a8] sm:$0xf]
    %v172 = vld [vmem:[#allocation7 + $0x1ac] sm:$0xf]
    %v173 = vld [vmem:[#allocation7 + $0x1b0] sm:$0xf]
    %v174 = vld [vmem:[#allocation7 + $0x1b4] sm:$0xf]
    %v175 = vld [vmem:[#allocation7 + $0x1b8] sm:$0xf]
    %v176 = vld [vmem:[#allocation7 + $0x1bc] sm:$0xf]
    %v177 = vld [vmem:[#allocation7 + $0x1c0] sm:$0xf]
    %v178 = vld [vmem:[#allocation7 + $0x1c4] sm:$0xf]
    %v179 = vld [vmem:[#allocation7 + $0x1c8] sm:$0xf]
    %v180 = vld [vmem:[#allocation7 + $0x1cc] sm:$0xf]
    %v181 = vld [vmem:[#allocation7 + $0x1d0] sm:$0xf]
    %v182 = vld [vmem:[#allocation7 + $0x1d4] sm:$0xf]
    %v183 = vld [vmem:[#allocation7 + $0x1d8] sm:$0xf]
    %v184 = vld [vmem:[#allocation7 + $0x1dc] sm:$0xf]
    %v185 = vld [vmem:[#allocation7 + $0x1e0] sm:$0xf]
    %v186 = vld [vmem:[#allocation7 + $0x1e4] sm:$0xf]
    %v187 = vld [vmem:[#allocation7 + $0x1e8] sm:$0xf]
    %v188 = vld [vmem:[#allocation7 + $0x1ec] sm:$0xf]
    %v189 = vld [vmem:[#allocation7 + $0x1f0] sm:$0xf]
    %v190 = vld [vmem:[#allocation7 + $0x1f4] sm:$0xf]
    %v191 = vld [vmem:[#allocation7 + $0x1f8] sm:$0xf]
    %v192 = vld [vmem:[#allocation7 + $0x1fc] sm:$0xf]
    %v197 = vunpack.c.l.b16 %v61
    %v198 = vunpack.c.h.b16 %v61
    %v199 = vunpack.c.l.b16 %v62
    %v200 = vunpack.c.h.b16 %v62
    %v201 = vunpack.c.l.b16 %v63
    %v202 = vunpack.c.h.b16 %v63
    %v203 = vunpack.c.l.b16 %v64
    %v204 = vunpack.c.h.b16 %v64
    %v205 = vpack.c.b16 %v197, %v197
    %v206 = vpack.c.b16 %v198, %v198
    %v207 = vpack.c.b16 %v199, %v199
    %v208 = vpack.c.b16 %v200, %v200
    %v209 = vpack.c.b16 %v201, %v201
    %v210 = vpack.c.b16 %v202, %v202
    %v211 = vpack.c.b16 %v203, %v203
    %v212 = vpack.c.b16 %v204, %v204
    %v349 = vunpack.c.l.b16 %v65
    %v350 = vunpack.c.l.b16 %v66
    %v351 = vunpack.c.l.b16 %v67
    %v352 = vunpack.c.l.b16 %v68
    %v353 = vunpack.c.l.b16 %v69
    %v354 = vunpack.c.l.b16 %v70
    %v355 = vunpack.c.l.b16 %v71
    %v356 = vunpack.c.l.b16 %v72
    %v357 = vunpack.c.l.b16 %v73
    %v358 = vunpack.c.l.b16 %v74
    %v359 = vunpack.c.l.b16 %v75
    %v360 = vunpack.c.l.b16 %v76
    %v361 = vunpack.c.l.b16 %v77
    %v362 = vunpack.c.l.b16 %v78
    %v363 = vunpack.c.l.b16 %v79
    %v364 = vunpack.c.l.b16 %v80
    %v365 = vunpack.c.l.b16 %v81
    %v366 = vunpack.c.l.b16 %v82
    %v367 = vunpack.c.l.b16 %v83
    %v368 = vunpack.c.l.b16 %v84
    %v369 = vunpack.c.l.b16 %v85
    %v370 = vunpack.c.l.b16 %v86
    %v371 = vunpack.c.l.b16 %v87
    %v372 = vunpack.c.l.b16 %v88
    %v373 = vunpack.c.l.b16 %v89
    %v374 = vunpack.c.l.b16 %v90
    %v375 = vunpack.c.l.b16 %v91
    %v376 = vunpack.c.l.b16 %v92
    %v377 = vunpack.c.l.b16 %v93
    %v378 = vunpack.c.l.b16 %v94
    %v379 = vunpack.c.l.b16 %v95
    %v380 = vunpack.c.l.b16 %v96
    %v381 = vunpack.c.l.b16 %v97
    %v382 = vunpack.c.l.b16 %v98
    %v383 = vunpack.c.l.b16 %v99
    %v384 = vunpack.c.l.b16 %v100
    %v385 = vunpack.c.l.b16 %v101
    %v386 = vunpack.c.l.b16 %v102
    %v387 = vunpack.c.l.b16 %v103
    %v388 = vunpack.c.l.b16 %v104
    %v389 = vunpack.c.l.b16 %v105
    %v390 = vunpack.c.l.b16 %v106
    %v391 = vunpack.c.l.b16 %v107
    %v392 = vunpack.c.l.b16 %v108
    %v393 = vunpack.c.l.b16 %v109
    %v394 = vunpack.c.l.b16 %v110
    %v395 = vunpack.c.l.b16 %v111
    %v396 = vunpack.c.l.b16 %v112
    %v397 = vunpack.c.l.b16 %v113
    %v398 = vunpack.c.l.b16 %v114
    %v399 = vunpack.c.l.b16 %v115
    %v400 = vunpack.c.l.b16 %v116
    %v401 = vunpack.c.l.b16 %v117
    %v402 = vunpack.c.l.b16 %v118
    %v403 = vunpack.c.l.b16 %v119
    %v404 = vunpack.c.l.b16 %v120
    %v405 = vunpack.c.l.b16 %v121
    %v406 = vunpack.c.l.b16 %v122
    %v407 = vunpack.c.l.b16 %v123
    %v408 = vunpack.c.l.b16 %v124
    %v409 = vunpack.c.l.b16 %v125
    %v410 = vunpack.c.l.b16 %v126
    %v411 = vunpack.c.l.b16 %v127
    %v412 = vunpack.c.l.b16 %v128
    %v413 = vunpack.c.l.b16 %v129
    %v414 = vunpack.c.l.b16 %v130
    %v415 = vunpack.c.l.b16 %v131
    %v416 = vunpack.c.l.b16 %v132
    %v417 = vunpack.c.l.b16 %v133
    %v418 = vunpack.c.l.b16 %v134
    %v419 = vunpack.c.l.b16 %v135
    %v420 = vunpack.c.l.b16 %v136
    %v421 = vunpack.c.l.b16 %v137
    %v422 = vunpack.c.l.b16 %v138
    %v423 = vunpack.c.l.b16 %v139
    %v424 = vunpack.c.l.b16 %v140
    %v425 = vunpack.c.l.b16 %v141
    %v426 = vunpack.c.l.b16 %v142
    %v427 = vunpack.c.l.b16 %v143
    %v428 = vunpack.c.l.b16 %v144
    %v429 = vunpack.c.l.b16 %v145
    %v430 = vunpack.c.l.b16 %v146
    %v431 = vunpack.c.l.b16 %v147
    %v432 = vunpack.c.l.b16 %v148
    %v433 = vunpack.c.l.b16 %v149
    %v434 = vunpack.c.l.b16 %v150
    %v435 = vunpack.c.l.b16 %v151
    %v436 = vunpack.c.l.b16 %v152
    %v437 = vunpack.c.l.b16 %v153
    %v438 = vunpack.c.l.b16 %v154
    %v439 = vunpack.c.l.b16 %v155
    %v440 = vunpack.c.l.b16 %v156
    %v441 = vunpack.c.l.b16 %v157
    %v442 = vunpack.c.l.b16 %v158
    %v443 = vunpack.c.l.b16 %v159
    %v444 = vunpack.c.l.b16 %v160
    %v445 = vunpack.c.l.b16 %v161
    %v446 = vunpack.c.l.b16 %v162
    %v447 = vunpack.c.l.b16 %v163
    %v448 = vunpack.c.l.b16 %v164
    %v449 = vunpack.c.l.b16 %v165
    %v450 = vunpack.c.l.b16 %v166
    %v451 = vunpack.c.l.b16 %v167
    %v452 = vunpack.c.l.b16 %v168
    %v453 = vunpack.c.l.b16 %v169
    %v454 = vunpack.c.l.b16 %v170
    %v455 = vunpack.c.l.b16 %v171
    %v456 = vunpack.c.l.b16 %v172
    %v457 = vunpack.c.l.b16 %v173
    %v458 = vunpack.c.l.b16 %v174
    %v459 = vunpack.c.l.b16 %v175
    %v460 = vunpack.c.l.b16 %v176
    %v461 = vunpack.c.l.b16 %v177
    %v462 = vunpack.c.l.b16 %v178
    %v463 = vunpack.c.l.b16 %v179
    %v464 = vunpack.c.l.b16 %v180
    %v465 = vunpack.c.l.b16 %v181
    %v466 = vunpack.c.l.b16 %v182
    %v467 = vunpack.c.l.b16 %v183
    %v468 = vunpack.c.l.b16 %v184
    %v469 = vunpack.c.l.b16 %v185
    %v470 = vunpack.c.l.b16 %v186
    %v471 = vunpack.c.l.b16 %v187
    %v472 = vunpack.c.l.b16 %v188
    %v473 = vunpack.c.l.b16 %v189
    %v474 = vunpack.c.l.b16 %v190
    %v475 = vunpack.c.l.b16 %v191
    %v476 = vunpack.c.l.b16 %v192
    %v477 = vpack.c.b16 %v350, %v349
    %v478 = vpack.c.b16 %v352, %v351
    %v479 = vpack.c.b16 %v354, %v353
    %v480 = vpack.c.b16 %v356, %v355
    %v481 = vpack.c.b16 %v358, %v357
    %v482 = vpack.c.b16 %v360, %v359
    %v483 = vpack.c.b16 %v362, %v361
    %v484 = vpack.c.b16 %v364, %v363
    %v485 = vpack.c.b16 %v366, %v365
    %v486 = vpack.c.b16 %v368, %v367
    %v487 = vpack.c.b16 %v370, %v369
    %v488 = vpack.c.b16 %v372, %v371
    %v489 = vpack.c.b16 %v374, %v373
    %v490 = vpack.c.b16 %v376, %v375
    %v491 = vpack.c.b16 %v378, %v377
    %v492 = vpack.c.b16 %v380, %v379
    %v493 = vpack.c.b16 %v382, %v381
    %v494 = vpack.c.b16 %v384, %v383
    %v495 = vpack.c.b16 %v386, %v385
    %v496 = vpack.c.b16 %v388, %v387
    %v497 = vpack.c.b16 %v390, %v389
    %v498 = vpack.c.b16 %v392, %v391
    %v499 = vpack.c.b16 %v394, %v393
    %v500 = vpack.c.b16 %v396, %v395
    %v501 = vpack.c.b16 %v398, %v397
    %v502 = vpack.c.b16 %v400, %v399
    %v503 = vpack.c.b16 %v402, %v401
    %v504 = vpack.c.b16 %v404, %v403
    %v505 = vpack.c.b16 %v406, %v405
    %v506 = vpack.c.b16 %v408, %v407
    %v507 = vpack.c.b16 %v410, %v409
    %v508 = vpack.c.b16 %v412, %v411
    %v509 = vpack.c.b16 %v414, %v413
    %v510 = vpack.c.b16 %v416, %v415
    %v511 = vpack.c.b16 %v418, %v417
    %v512 = vpack.c.b16 %v420, %v419
    %v513 = vpack.c.b16 %v422, %v421
    %v514 = vpack.c.b16 %v424, %v423
    %v515 = vpack.c.b16 %v426, %v425
    %v516 = vpack.c.b16 %v428, %v427
    %v517 = vpack.c.b16 %v430, %v429
    %v518 = vpack.c.b16 %v432, %v431
    %v519 = vpack.c.b16 %v434, %v433
    %v520 = vpack.c.b16 %v436, %v435
    %v521 = vpack.c.b16 %v438, %v437
    %v522 = vpack.c.b16 %v440, %v439
    %v523 = vpack.c.b16 %v442, %v441
    %v524 = vpack.c.b16 %v444, %v443
    %v525 = vpack.c.b16 %v446, %v445
    %v526 = vpack.c.b16 %v448, %v447
    %v527 = vpack.c.b16 %v450, %v449
    %v528 = vpack.c.b16 %v452, %v451
    %v529 = vpack.c.b16 %v454, %v453
    %v530 = vpack.c.b16 %v456, %v455
    %v531 = vpack.c.b16 %v458, %v457
    %v532 = vpack.c.b16 %v460, %v459
    %v533 = vpack.c.b16 %v462, %v461
    %v534 = vpack.c.b16 %v464, %v463
    %v535 = vpack.c.b16 %v466, %v465
    %v536 = vpack.c.b16 %v468, %v467
    %v537 = vpack.c.b16 %v470, %v469
    %v538 = vpack.c.b16 %v472, %v471
    %v539 = vpack.c.b16 %v474, %v473
    %v540 = vpack.c.b16 %v476, %v475
    %605 = vmatprep.subr.bf16.mxu0 0
    %606 = vmatpush1.bf16.msra.mxu0 %v477
    %607 = vmatprep.subr.bf16.mxu0 0
    %608 = vmatpush1.bf16.msra.mxu0 %v478
    %609 = vmatprep.subr.bf16.mxu0 0
    %610 = vmatpush1.bf16.msra.mxu0 %v479
    %611 = vmatprep.subr.bf16.mxu0 0
    %612 = vmatpush1.bf16.msra.mxu0 %v480
    %613 = vmatprep.subr.bf16.mxu0 0
    %614 = vmatpush1.bf16.msra.mxu0 %v481
    %615 = vmatprep.subr.bf16.mxu0 0
    %616 = vmatpush1.bf16.msra.mxu0 %v482
    %617 = vmatprep.subr.bf16.mxu0 0
    %618 = vmatpush1.bf16.msra.mxu0 %v483
    %619 = vmatprep.subr.bf16.mxu0 0
    %620 = vmatpush1.bf16.msra.mxu0 %v484
    %621 = vmatprep.subr.bf16.mxu0 0
    %622 = vmatpush1.bf16.msra.mxu0 %v485
    %623 = vmatprep.subr.bf16.mxu0 0
    %624 = vmatpush1.bf16.msra.mxu0 %v486
    %625 = vmatprep.subr.bf16.mxu0 0
    %626 = vmatpush1.bf16.msra.mxu0 %v487
    %627 = vmatprep.subr.bf16.mxu0 0
    %628 = vmatpush1.bf16.msra.mxu0 %v488
    %629 = vmatprep.subr.bf16.mxu0 0
    %630 = vmatpush1.bf16.msra.mxu0 %v489
    %631 = vmatprep.subr.bf16.mxu0 0
    %632 = vmatpush1.bf16.msra.mxu0 %v490
    %633 = vmatprep.subr.bf16.mxu0 0
    %634 = vmatpush1.bf16.msra.mxu0 %v491
    %635 = vmatprep.subr.bf16.mxu0 0
    %636 = vmatpush1.bf16.msra.mxu0 %v492
    %637 = vmatprep.mubr.bf16.mxu0 %v206
    %638 = vmatmul.mubr.bf16.gmra.mrb[0].mxu0 %v205
    %v639 = vpop.f32.mrb[0].mxu0
    %v640 = vadd.f32 0.0, %v639
    %v641 = vpop.f32.mrb[0].mxu0
    %v642 = vpop.f32.mrb[0].mxu0
    %v643 = vpop.f32.mrb[0].mxu0
    %644 = vdwg.mxu0
    %645 = vmatprep.subr.bf16.mxu0 0
    %646 = vmatpush1.bf16.msra.mxu0 %v493
    %647 = vmatprep.subr.bf16.mxu0 0
    %648 = vmatpush1.bf16.msra.mxu0 %v494
    %649 = vmatprep.subr.bf16.mxu0 0
    %650 = vmatpush1.bf16.msra.mxu0 %v495
    %651 = vmatprep.subr.bf16.mxu0 0
    %652 = vmatpush1.bf16.msra.mxu0 %v496
    %653 = vmatprep.subr.bf16.mxu0 0
    %654 = vmatpush1.bf16.msra.mxu0 %v497
    %655 = vmatprep.subr.bf16.mxu0 0
    %656 = vmatpush1.bf16.msra.mxu0 %v498
    %657 = vmatprep.subr.bf16.mxu0 0
    %658 = vmatpush1.bf16.msra.mxu0 %v499
    %659 = vmatprep.subr.bf16.mxu0 0
    %660 = vmatpush1.bf16.msra.mxu0 %v500
    %661 = vmatprep.subr.bf16.mxu0 0
    %662 = vmatpush1.bf16.msra.mxu0 %v501
    %663 = vmatprep.subr.bf16.mxu0 0
    %664 = vmatpush1.bf16.msra.mxu0 %v502
    %665 = vmatprep.subr.bf16.mxu0 0
    %666 = vmatpush1.bf16.msra.mxu0 %v503
    %667 = vmatprep.subr.bf16.mxu0 0
    %668 = vmatpush1.bf16.msra.mxu0 %v504
    %669 = vmatprep.subr.bf16.mxu0 0
    %670 = vmatpush1.bf16.msra.mxu0 %v505
    %671 = vmatprep.subr.bf16.mxu0 0
    %672 = vmatpush1.bf16.msra.mxu0 %v506
    %673 = vmatprep.subr.bf16.mxu0 0
    %674 = vmatpush1.bf16.msra.mxu0 %v507
    %675 = vmatprep.subr.bf16.mxu0 0
    %676 = vmatpush1.bf16.msra.mxu0 %v508
    %677 = vmatprep.mubr.bf16.mxu0 %v208
    %678 = vmatmul.mubr.bf16.gmra.mrb[0].mxu0 %v207
    %v679 = vpop.f32.mrb[0].mxu0
    %v680 = vadd.f32 %v640, %v679
    %v681 = vpop.f32.mrb[0].mxu0
    %v682 = vpop.f32.mrb[0].mxu0
    %v683 = vpop.f32.mrb[0].mxu0
    %684 = vdwg.mxu0
    %685 = vmatprep.subr.bf16.mxu0 0
    %686 = vmatpush1.bf16.msra.mxu0 %v509
    %687 = vmatprep.subr.bf16.mxu0 0
    %688 = vmatpush1.bf16.msra.mxu0 %v510
    %689 = vmatprep.subr.bf16.mxu0 0
    %690 = vmatpush1.bf16.msra.mxu0 %v511
    %691 = vmatprep.subr.bf16.mxu0 0
    %692 = vmatpush1.bf16.msra.mxu0 %v512
    %693 = vmatprep.subr.bf16.mxu0 0
    %694 = vmatpush1.bf16.msra.mxu0 %v513
    %695 = vmatprep.subr.bf16.mxu0 0
    %696 = vmatpush1.bf16.msra.mxu0 %v514
    %697 = vmatprep.subr.bf16.mxu0 0
    %698 = vmatpush1.bf16.msra.mxu0 %v515
    %699 = vmatprep.subr.bf16.mxu0 0
    %700 = vmatpush1.bf16.msra.mxu0 %v516
    %701 = vmatprep.subr.bf16.mxu0 0
    %702 = vmatpush1.bf16.msra.mxu0 %v517
    %703 = vmatprep.subr.bf16.mxu0 0
    %704 = vmatpush1.bf16.msra.mxu0 %v518
    %705 = vmatprep.subr.bf16.mxu0 0
    %706 = vmatpush1.bf16.msra.mxu0 %v519
    %707 = vmatprep.subr.bf16.mxu0 0
    %708 = vmatpush1.bf16.msra.mxu0 %v520
    %709 = vmatprep.subr.bf16.mxu0 0
    %710 = vmatpush1.bf16.msra.mxu0 %v521
    %711 = vmatprep.subr.bf16.mxu0 0
    %712 = vmatpush1.bf16.msra.mxu0 %v522
    %713 = vmatprep.subr.bf16.mxu0 0
    %714 = vmatpush1.bf16.msra.mxu0 %v523
    %715 = vmatprep.subr.bf16.mxu0 0
    %716 = vmatpush1.bf16.msra.mxu0 %v524
    %717 = vmatprep.mubr.bf16.mxu0 %v210
    %718 = vmatmul.mubr.bf16.gmra.mrb[0].mxu0 %v209
    %v719 = vpop.f32.mrb[0].mxu0
    %v720 = vadd.f32 %v680, %v719
    %v721 = vpop.f32.mrb[0].mxu0
    %v722 = vpop.f32.mrb[0].mxu0
    %v723 = vpop.f32.mrb[0].mxu0
    %724 = vdwg.mxu0
    %725 = vmatprep.subr.bf16.mxu0 0
    %726 = vmatpush1.bf16.msra.mxu0 %v525
    %727 = vmatprep.subr.bf16.mxu0 0
    %728 = vmatpush1.bf16.msra.mxu0 %v526
    %729 = vmatprep.subr.bf16.mxu0 0
    %730 = vmatpush1.bf16.msra.mxu0 %v527
    %731 = vmatprep.subr.bf16.mxu0 0
    %732 = vmatpush1.bf16.msra.mxu0 %v528
    %733 = vmatprep.subr.bf16.mxu0 0
    %734 = vmatpush1.bf16.msra.mxu0 %v529
    %735 = vmatprep.subr.bf16.mxu0 0
    %736 = vmatpush1.bf16.msra.mxu0 %v530
    %737 = vmatprep.subr.bf16.mxu0 0
    %738 = vmatpush1.bf16.msra.mxu0 %v531
    %739 = vmatprep.subr.bf16.mxu0 0
    %740 = vmatpush1.bf16.msra.mxu0 %v532
    %741 = vmatprep.subr.bf16.mxu0 0
    %742 = vmatpush1.bf16.msra.mxu0 %v533
    %743 = vmatprep.subr.bf16.mxu0 0
    %744 = vmatpush1.bf16.msra.mxu0 %v534
    %745 = vmatprep.subr.bf16.mxu0 0
    %746 = vmatpush1.bf16.msra.mxu0 %v535
    %747 = vmatprep.subr.bf16.mxu0 0
    %748 = vmatpush1.bf16.msra.mxu0 %v536
    %749 = vmatprep.subr.bf16.mxu0 0
    %750 = vmatpush1.bf16.msra.mxu0 %v537
    %751 = vmatprep.subr.bf16.mxu0 0
    %752 = vmatpush1.bf16.msra.mxu0 %v538
    %753 = vmatprep.subr.bf16.mxu0 0
    %754 = vmatpush1.bf16.msra.mxu0 %v539
    %755 = vmatprep.subr.bf16.mxu0 0
    %756 = vmatpush1.bf16.msra.mxu0 %v540
    %757 = vmatprep.mubr.bf16.mxu0 %v212
    %758 = vmatmul.mubr.bf16.gmra.mrb[0].mxu0 %v211
    %v759 = vpop.f32.mrb[0].mxu0
    %v760 = vadd.f32 %v720, %v759
    %v761 = vpop.f32.mrb[0].mxu0
    %v762 = vpop.f32.mrb[0].mxu0
    %v763 = vpop.f32.mrb[0].mxu0
    %764 = vdwg.mxu0
    %p765 = scmp.eq.s32.totalorder 0, 0
    // Predicated region
    $region34: #{tpu_custom_call.1} parent=1 // pred_check
      %p766 = pneg %p765
    $region35: #{tpu_custom_call.1} parent=1 // pred_check_branch
      %768 = sbr.rel (%p766) target = $region37
    $region36: #{tpu_custom_call.1} parent=1 // pred_region
      %769 = vst [vmem:[#allocation2] sm:$0xff] %v760
    $region37: #{tpu_custom_call.1} parent=1 // pred_fallthru
      _
    %p770 = scmp.gt.s32.totalorder 0, 0
    // Predicated region
    $region38: #{tpu_custom_call.1} parent=1 // pred_check
      %p771 = pneg %p770
    $region39: #{tpu_custom_call.1} parent=1 // pred_check_branch
      %773 = sbr.rel (%p771) target = $region41
    $region40: #{tpu_custom_call.1} parent=1 // pred_region
      %v774 = vld [vmem:[#allocation2] sm:$0xff]
      %v775 = vadd.f32 %v774, %v760
      %776 = vst [vmem:[#allocation2] sm:$0xff] %v775
    $region41: #{tpu_custom_call.1} parent=1 // pred_fallthru
      _
    // Predicated region
    $region42: #{tpu_custom_call.1} parent=1 // pred_check
      %p777 = pneg %p765
    $region43: #{tpu_custom_call.1} parent=1 // pred_check_branch
      %779 = sbr.rel (%p777) target = $region45
    $region44: #{tpu_custom_call.1} parent=1 // pred_region
      %v780 = vld [vmem:[#allocation2] sm:$0xff]
      %v781 = vld [vmem:[%s2] sm:$0x1]
      %v783 = vlaneseq
      %v784 = vshrl.u32 %v783, 7
      %v785 = vsub.s32 0, %v784
      %v786 = vrot.slane %v781, %v785
      %v788 = vadd.f32 %v780, %v786
      %v789 = vmax.f32 %v788, 0.0
      %v790 = vpack.c.bf16 %v789, %v789
      %791 = vst [vmem:[#allocation3] sm:$0xf] %v790
      %v792 = vld [vmem:[#allocation3] sm:$0xf]
      %v793 = vld [vmem:[#allocation9] sm:$0xf]
      %v794 = vld [vmem:[#allocation9 + $0x4] sm:$0xf]
      %v795 = vld [vmem:[#allocation9 + $0x8] sm:$0xf]
      %v796 = vld [vmem:[#allocation9 + $0xc] sm:$0xf]
      %v797 = vld [vmem:[#allocation9 + $0x10] sm:$0xf]
      %v798 = vld [vmem:[#allocation9 + $0x14] sm:$0xf]
      %v799 = vld [vmem:[#allocation9 + $0x18] sm:$0xf]
      %v800 = vld [vmem:[#allocation9 + $0x1c] sm:$0xf]
      %v801 = vld [vmem:[#allocation9 + $0x20] sm:$0xf]
      %v802 = vld [vmem:[#allocation9 + $0x24] sm:$0xf]
      %v803 = vld [vmem:[#allocation9 + $0x28] sm:$0xf]
      %v804 = vld [vmem:[#allocation9 + $0x2c] sm:$0xf]
      %v805 = vld [vmem:[#allocation9 + $0x30] sm:$0xf]
      %v806 = vld [vmem:[#allocation9 + $0x34] sm:$0xf]
      %v807 = vld [vmem:[#allocation9 + $0x38] sm:$0xf]
      %v808 = vld [vmem:[#allocation9 + $0x3c] sm:$0xf]
      %v809 = vld [vmem:[%s4] sm:$0x1]
      %v811 = vlaneseq
      %v812 = vshrl.u32 %v811, 7
      %v813 = vsub.s32 0, %v812
      %v814 = vrot.slane %v809, %v813
      %v832 = vunpack.c.l.b16 %v793
      %v833 = vunpack.c.l.b16 %v794
      %v834 = vunpack.c.l.b16 %v795
      %v835 = vunpack.c.l.b16 %v796
      %v836 = vunpack.c.l.b16 %v797
      %v837 = vunpack.c.l.b16 %v798
      %v838 = vunpack.c.l.b16 %v799
      %v839 = vunpack.c.l.b16 %v800
      %v840 = vunpack.c.l.b16 %v801
      %v841 = vunpack.c.l.b16 %v802
      %v842 = vunpack.c.l.b16 %v803
      %v843 = vunpack.c.l.b16 %v804
      %v844 = vunpack.c.l.b16 %v805
      %v845 = vunpack.c.l.b16 %v806
      %v846 = vunpack.c.l.b16 %v807
      %v847 = vunpack.c.l.b16 %v808
      %v848 = vpack.c.b16 %v833, %v832
      %v849 = vpack.c.b16 %v835, %v834
      %v850 = vpack.c.b16 %v837, %v836
      %v851 = vpack.c.b16 %v839, %v838
      %v852 = vpack.c.b16 %v841, %v840
      %v853 = vpack.c.b16 %v843, %v842
      %v854 = vpack.c.b16 %v845, %v844
      %v855 = vpack.c.b16 %v847, %v846
      %864 = vmatprep.subr.bf16.mxu0 0
      %865 = vmatpush1.bf16.msra.mxu0 %v848
      %866 = vmatprep.subr.bf16.mxu0 0
      %867 = vmatpush1.bf16.msra.mxu0 %v849
      %868 = vmatprep.subr.bf16.mxu0 0
      %869 = vmatpush1.bf16.msra.mxu0 %v850
      %870 = vmatprep.subr.bf16.mxu0 0
      %871 = vmatpush1.bf16.msra.mxu0 %v851
      %872 = vmatprep.subr.bf16.mxu0 0
      %873 = vmatpush1.bf16.msra.mxu0 %v852
      %874 = vmatprep.subr.bf16.mxu0 0
      %875 = vmatpush1.bf16.msra.mxu0 %v853
      %876 = vmatprep.subr.bf16.mxu0 0
      %877 = vmatpush1.bf16.msra.mxu0 %v854
      %878 = vmatprep.subr.bf16.mxu0 0
      %879 = vmatpush1.bf16.msra.mxu0 %v855
      %880 = vmatprep.subr.bf16.mxu0 0
      %881 = vmatpush1.bf16.msra.mxu0 0
      %882 = vmatprep.subr.bf16.mxu0 0
      %883 = vmatpush1.bf16.msra.mxu0 0
      %884 = vmatprep.subr.bf16.mxu0 0
      %885 = vmatpush1.bf16.msra.mxu0 0
      %886 = vmatprep.subr.bf16.mxu0 0
      %887 = vmatpush1.bf16.msra.mxu0 0
      %888 = vmatprep.subr.bf16.mxu0 0
      %889 = vmatpush1.bf16.msra.mxu0 0
      %890 = vmatprep.subr.bf16.mxu0 0
      %891 = vmatpush1.bf16.msra.mxu0 0
      %892 = vmatprep.subr.bf16.mxu0 0
      %893 = vmatpush1.bf16.msra.mxu0 0
      %894 = vmatprep.subr.bf16.mxu0 0
      %895 = vmatpush1.bf16.msra.mxu0 0
      %896 = vmatprep.mubr.bf16.mxu0 0
      %897 = vmatmul.mubr.bf16.gmra.mrb[0].mxu0 %v792
      %v898 = vpop.f32.mrb[0].mxu0
      %v899 = vadd.f32 %v814, %v898
      %v900 = vpop.f32.mrb[0].mxu0
      %v901 = vpop.f32.mrb[0].mxu0
      %v902 = vpop.f32.mrb[0].mxu0
      %903 = vdwg.mxu0
      %v904 = vmax.f32 %v899, 0.0
      %v905 = vpack.c.bf16 %v904, %v904
      %906 = vst [vmem:[#allocation10] sm:$0xf] %v905
    $region45: #{tpu_custom_call.1} parent=1 // pred_fallthru
      _
    // Predicated region
    $region46: #{tpu_custom_call.1} parent=1 // pred_check
      _
    $region47: #{tpu_custom_call.1} parent=1 // pred_check_branch
      %908 = sbr.rel (0) target = $region49
    $region48: #{tpu_custom_call.1} parent=1 // pred_region
      %s910 = ssub.s32 64, 64
      %911 = vsyncadd [#allocation6], %s910
      %s913 = sshll.u32 [#allocation10], 4
      %s914 = int_to_ptr.vmem [resolvable:$true] %s913
      %916 = dma.vmem_to_hbm [thread:$0]  %s914, 64, %s5, [#allocation6]
    $region49: #{tpu_custom_call.1} parent=1 // pred_fallthru
      _
    // Predicated region
    $region50: #{tpu_custom_call.1} parent=1 // pred_check
      _
    $region51: #{tpu_custom_call.1} parent=1 // pred_check_branch
      %918 = sbr.rel (0) target = $region53
    $region52: #{tpu_custom_call.1} parent=1 // pred_region
      %919 = dma.done [#allocation6], 64
    $region53: #{tpu_custom_call.1} parent=1 // pred_fallthru
      _
    %920 = vsyncpa [#allocation5], 1
    %921 = vsyncpa [#allocation8], 1
    %922 = vsyncpa [#allocation6], 1

</llo_original>
